<compile_context>
chip_gen: v6e
topology: v6e:2x2x1
jax: 0.10.0
libtpu: 0.0.40
codegen_flags: <defaults>
</compile_context>

<pallas_src>
import jax
import jax.numpy as jnp
from jax.experimental import pallas as pl
from jax.experimental.pallas import tpu as pltpu

LANE = 128


# ---------------- Pallas kernel ----------------
def in_kernel(
    # per-group graph tiles (bf16)
    Rp_ref, X_ref, Mbd_ref,
    # fR weights: fused first layer, stacked hidden layers, stacked biases, output
    wr0_ref, wrh_ref, brR_ref, wr4_ref, br4_ref,
    # fO weights: first layer split (E / X parts) to absorb the concat, output
    wo0E_ref, wo0X_ref, bo0_ref, wo1_ref, bo1_ref,
    # output (f32, lane-padded)
    P_ref,
):
    brR = brR_ref[...]  # (4, d_Ehp) f32 — fR biases, kept f32 for the VPU path

    # fR layer 0: single fused matmul over pre-concatenated [R | O_src | O_tgt]
    h = jnp.dot(Rp_ref[...], wr0_ref[...], preferred_element_type=jnp.float32)
    h = jnp.maximum(h + brR[0:1, :], 0.0)

    # fR hidden layers 1-3 (bf16 MXU operands, f32 accumulation + bias + ReLU)
    for i in range(3):
        h = jnp.dot(h.astype(jnp.bfloat16), wrh_ref[i],
                    preferred_element_type=jnp.float32)
        h = jnp.maximum(h + brR[i + 1:i + 2, :], 0.0)

    # fR output layer -> per-relation effects E  (G*m, d_Ep)
    E = jnp.dot(h.astype(jnp.bfloat16), wr4_ref[...],
                preferred_element_type=jnp.float32) + br4_ref[...]

    # target aggregation: block-diagonal Mtgt (G*n, G*m) @ E — graphs stay separated
    agg = jnp.dot(Mbd_ref[...], E.astype(jnp.bfloat16),
                  preferred_element_type=jnp.float32)

    # fO layer 0, concat-free: [Mtgt@E | X] @ W0  ==  agg@W0_E + X@W0_X
    h2 = jnp.dot(agg.astype(jnp.bfloat16), wo0E_ref[...],
                 preferred_element_type=jnp.float32)
    h2 = h2 + jnp.dot(X_ref[...], wo0X_ref[...], preferred_element_type=jnp.float32)
    h2 = jnp.maximum(h2 + bo0_ref[...], 0.0)

    # fO output layer — lane-dense (padded) store
    P_ref[...] = jnp.dot(h2.astype(jnp.bfloat16), wo1_ref[...],
                         preferred_element_type=jnp.float32) + bo1_ref[...]


# ---------------- helpers ----------------
def _round_up(v, mult):
    return ((v + mult - 1) // mult) * mult


def _pad_last(x, target):
    pad = target - x.shape[-1]
    if pad == 0:
        return x
    return jnp.pad(x, [(0, 0)] * (x.ndim - 1) + [(0, pad)])


def _pad2d(w, rows, cols):
    return jnp.pad(w, ((0, rows - w.shape[0]), (0, cols - w.shape[1])))


def _choose_group_size(B, m, target_rows=256):
    """Graphs per grid step: aim for ~target_rows MXU rows, keep >=2 grid steps."""
    G = max(1, min(B, target_rows // max(m, 1)))
    if B >= 2:
        G = max(1, min(G, B // 2))   # >=2 parallel steps -> both v7x TensorCores busy
    while B % G != 0:
        G -= 1
    return G


# ---------------- wrapper ----------------
def interaction_network(O, R, X, Msrc, Mtgt, params):
    """Batched IN forward.

    O: (B, n, d_O), R: (B, m, d_R), X: (B, n, d_X), Msrc/Mtgt: (B, n, m).
    Returns P: (B, n, d_P).
    """
    B, n, d_O = O.shape
    _, m, d_R = R.shape
    d_X = X.shape[-1]
    d_Eh = params["wr1"].shape[0]
    d_E = params["wr4"].shape[1]
    d_Ph = params["wo1"].shape[0]
    d_P = params["wo1"].shape[1]

    d_in_R = d_R + 2 * d_O
    d_inRp = _round_up(d_in_R, LANE)
    d_Xp = _round_up(d_X, LANE)
    d_Ehp = _round_up(d_Eh, LANE)
    d_Ep = _round_up(d_E, LANE)
    d_Php = _round_up(d_Ph, LANE)
    d_Pp = _round_up(d_P, LANE)

    G = _choose_group_size(B, m)
    num_groups = B // G

    # --- wrapper-side gather + concat (exact: plain matmul with the incidence) ---
    Rsrc = jnp.einsum("bnm,bnd->bmd", Msrc, O)            # == Msrc.T @ O per graph
    Rtgt = jnp.einsum("bnm,bnd->bmd", Mtgt, O)            # == Mtgt.T @ O per graph
    R_prime = jnp.concatenate([R, Rsrc, Rtgt], axis=-1)   # (B, m, d_R + 2*d_O)
    R_prime = _pad_last(R_prime, d_inRp).reshape(num_groups, G * m, d_inRp)
    X_p = _pad_last(X, d_Xp).reshape(num_groups, G * n, d_Xp)

    # block-diagonal target incidence per group (off-diagonal blocks exactly zero)
    Mtgt_g = Mtgt.reshape(num_groups, G, n, m)
    eye = jnp.eye(G, dtype=Mtgt.dtype)
    Mbd = jnp.einsum("xgnm,gh->xgnhm", Mtgt_g, eye).reshape(num_groups, G * n, G * m)

    # --- weights: fused / stacked, zero-padded, bf16 MXU operands, f32 biases ---
    bf16 = jnp.bfloat16
    wr0 = _pad2d(params["wr0"], d_inRp, d_Ehp).astype(bf16)
    wrh = jnp.stack(
        [_pad2d(params[f"wr{i}"], d_Ehp, d_Ehp) for i in (1, 2, 3)]
    ).astype(bf16)                                                   # (3, d_Ehp, d_Ehp)
    brR = jnp.concatenate(
        [_pad2d(params[f"br{i}"], 1, d_Ehp) for i in range(4)], axis=0
    )                                                                # (4, d_Ehp) f32
    wr4 = _pad2d(params["wr4"], d_Ehp, d_Ep).astype(bf16)
    br4 = _pad2d(params["br4"], 1, d_Ep)
    wo0 = params["wo0"]                                              # (d_E + d_X, d_Ph)
    wo0_E = _pad2d(wo0[:d_E], d_Ep, d_Php).astype(bf16)
    wo0_X = _pad2d(wo0[d_E:], d_Xp, d_Php).astype(bf16)
    bo0 = _pad2d(params["bo0"], 1, d_Php)
    wo1 = _pad2d(params["wo1"], d_Php, d_Pp).astype(bf16)
    bo1 = _pad2d(params["bo1"], 1, d_Pp)

    graph_inputs = (R_prime.astype(bf16), X_p.astype(bf16), Mbd.astype(bf16))
    weights = (wr0, wrh, brR, wr4, br4, wo0_E, wo0_X, bo0, wo1, bo1)

    # Per-group tiles stream along the (parallel) grid axis; weights get constant
    # index_maps so they are DMA'd once and stay VMEM-resident across the grid.
    def graph_spec(x):
        return pl.BlockSpec((None,) + x.shape[1:], lambda b: (b, 0, 0))

    def weight_spec(w):
        zeros = (0,) * w.ndim
        return pl.BlockSpec(w.shape, lambda b, z=zeros: z)

    in_specs = [graph_spec(x) for x in graph_inputs] + [weight_spec(w) for w in weights]
    out_spec = pl.BlockSpec((None, G * n, d_Pp), lambda b: (b, 0, 0))

    fn = pl.pallas_call(
        in_kernel,
        out_shape=jax.ShapeDtypeStruct((num_groups, G * n, d_Pp), jnp.float32),
        grid=(num_groups,),
        in_specs=in_specs,
        out_specs=out_spec,
        compiler_params=pltpu.CompilerParams(
            dimension_semantics=("parallel",),
        ),
    )
    P_padded = fn(*graph_inputs, *weights)
    return P_padded.reshape(B, n, d_Pp)[..., :d_P]


# ---------------- parameter construction (deterministic, synthetic) ----------------
def make_params(key, d_O, d_R, d_X, d_P):
    d_E_hidden, d_E = 150, 50
    d_P_hidden = 100
    fR_dims = [d_R + 2 * d_O] + [d_E_hidden] * 4 + [d_E]
    fO_dims = [d_E + d_X, d_P_hidden, d_P]

    params = {}
    keys = jax.random.split(key, 16)
    ki = 0

    def linear(name, d_in, d_out):
        nonlocal ki
        w = jax.random.normal(keys[ki], (d_in, d_out), jnp.float32) * (1.0 / jnp.sqrt(d_in))
        b = jax.random.normal(keys[ki + 1], (1, d_out), jnp.float32) * 0.05
        ki += 2
        params["w" + name] = w
        params["b" + name] = b

    for i in range(5):  # fR: 4 hidden + output
        linear(f"r{i}", fR_dims[i], fR_dims[i + 1])
    for i in range(2):  # fO: 1 hidden + output
        linear(f"o{i}", fO_dims[i], fO_dims[i + 1])
    return params


# ---------------- pure-JAX f32 reference (single graph) ----------------
def reference(O, R, X, Msrc, Mtgt, p):
    Rsrc = Msrc.T @ O
    Rtgt = Mtgt.T @ O
    Rp = jnp.concatenate([R, Rsrc, Rtgt], axis=1)
    h = Rp
    for i in range(4):
        h = jnp.maximum(h @ p[f"wr{i}"] + p[f"br{i}"], 0.0)
    E = h @ p["wr4"] + p["br4"]
    Ep = jnp.concatenate([Mtgt @ E, X], axis=1)
    h2 = jnp.maximum(Ep @ p["wo0"] + p["bo0"], 0.0)
    return h2 @ p["wo1"] + p["bo1"]


if __name__ == "__main__":
    B = 4                   # graphs; grouped G per grid step, >=2 parallel steps
    n, m = 8, 16            # objects, relations per graph
    d_O, d_R, d_X, d_P = 4, 3, 2, 5

    key = jax.random.PRNGKey(0)
    k_o, k_r, k_x, k_s, k_t, k_p = jax.random.split(key, 6)

    O = jax.random.normal(k_o, (B, n, d_O), jnp.float32)
    R = jax.random.normal(k_r, (B, m, d_R), jnp.float32)
    X = jax.random.normal(k_x, (B, n, d_X), jnp.float32)
    # one-hot incidence matrices of shape (B, n, m), as in the matmul-based IN
    src_idx = jax.random.randint(k_s, (B, m), 0, n)
    tgt_idx = jax.random.randint(k_t, (B, m), 0, n)
    Msrc = jnp.swapaxes(jax.nn.one_hot(src_idx, n, dtype=jnp.float32), 1, 2)
    Mtgt = jnp.swapaxes(jax.nn.one_hot(tgt_idx, n, dtype=jnp.float32), 1, 2)

    params = make_params(k_p, d_O, d_R, d_X, d_P)

    P = interaction_network(O, R, X, Msrc, Mtgt, params)
    P = jax.block_until_ready(P)

    ref_fn = jax.vmap(reference, in_axes=(0, 0, 0, 0, 0, None))
    P_ref = ref_fn(O, R, X, Msrc, Mtgt, params)
    assert P.shape == (B, n, d_P)
    # bf16 MXU operands vs f32 reference: relaxed tolerance (f32 accumulation kept)
    max_err = float(jnp.max(jnp.abs(P - P_ref)))
    assert jnp.allclose(P, P_ref, atol=5e-2, rtol=5e-2), (
        f"mismatch vs pure-JAX reference (max abs err {max_err})"
    )

    print("KERNEL_OK")
</pallas_src>

<mosaic_0001>
module attributes {stable_mosaic.version = 11 : i64} {
  func.func @in_kernel(%arg0: i32, %arg1: memref<1x32x128xbf16, #tpu.memory_space<vmem>>, %arg2: memref<1x16x128xbf16, #tpu.memory_space<vmem>>, %arg3: memref<1x16x32xbf16, #tpu.memory_space<vmem>>, %arg4: memref<128x256xbf16, #tpu.memory_space<vmem>>, %arg5: memref<3x256x256xbf16, #tpu.memory_space<vmem>>, %arg6: memref<4x256xf32, #tpu.memory_space<vmem>>, %arg7: memref<256x128xbf16, #tpu.memory_space<vmem>>, %arg8: memref<1x128xf32, #tpu.memory_space<vmem>>, %arg9: memref<128x128xbf16, #tpu.memory_space<vmem>>, %arg10: memref<128x128xbf16, #tpu.memory_space<vmem>>, %arg11: memref<1x128xf32, #tpu.memory_space<vmem>>, %arg12: memref<128x128xbf16, #tpu.memory_space<vmem>>, %arg13: memref<1x128xf32, #tpu.memory_space<vmem>>, %arg14: memref<1x16x128xf32, #tpu.memory_space<vmem>>) attributes {dimension_semantics = [#tpu.dimension_semantics<parallel>], iteration_bounds = array<i64: 2>, scalar_prefetch = 0 : i64, scratch_operands = 0 : i64, tpu.core_type = #tpu.core_type<tc>, window_params = [{transform_indices = @transform_0, window_bounds = array<i64: 1, 32, 128>}, {transform_indices = @transform_1, window_bounds = array<i64: 1, 16, 128>}, {transform_indices = @transform_2, window_bounds = array<i64: 1, 16, 32>}, {pipeline_mode = #tpu.pipeline_mode<synchronous>, transform_indices = @transform_3, window_bounds = array<i64: 128, 256>}, {pipeline_mode = #tpu.pipeline_mode<synchronous>, transform_indices = @transform_4, window_bounds = array<i64: 3, 256, 256>}, {pipeline_mode = #tpu.pipeline_mode<synchronous>, transform_indices = @transform_5, window_bounds = array<i64: 4, 256>}, {pipeline_mode = #tpu.pipeline_mode<synchronous>, transform_indices = @transform_6, window_bounds = array<i64: 256, 128>}, {pipeline_mode = #tpu.pipeline_mode<synchronous>, transform_indices = @transform_7, window_bounds = array<i64: 1, 128>}, {pipeline_mode = #tpu.pipeline_mode<synchronous>, transform_indices = @transform_8, window_bounds = array<i64: 128, 128>}, {pipeline_mode = #tpu.pipeline_mode<synchronous>, transform_indices = @transform_9, window_bounds = array<i64: 128, 128>}, {pipeline_mode = #tpu.pipeline_mode<synchronous>, transform_indices = @transform_10, window_bounds = array<i64: 1, 128>}, {pipeline_mode = #tpu.pipeline_mode<synchronous>, transform_indices = @transform_11, window_bounds = array<i64: 128, 128>}, {pipeline_mode = #tpu.pipeline_mode<synchronous>, transform_indices = @transform_12, window_bounds = array<i64: 1, 128>}, {transform_indices = @transform_13, window_bounds = array<i64: 1, 16, 128>}]} {
    %c0 = arith.constant 0 : index
    %c0_0 = arith.constant 0 : index
    %0 = vector.load %arg6[%c0, %c0_0] : memref<4x256xf32, #tpu.memory_space<vmem>>, vector<4x256xf32>
    %c0_1 = arith.constant 0 : index
    %c0_2 = arith.constant 0 : index
    %c0_3 = arith.constant 0 : index
    %1 = vector.load %arg1[%c0_1, %c0_2, %c0_3] : memref<1x32x128xbf16, #tpu.memory_space<vmem>>, vector<1x32x128xbf16>
    %2 = vector.shape_cast %1 : vector<1x32x128xbf16> to vector<32x128xbf16>
    %c0_4 = arith.constant 0 : index
    %c0_5 = arith.constant 0 : index
    %3 = vector.load %arg4[%c0_4, %c0_5] : memref<128x256xbf16, #tpu.memory_space<vmem>>, vector<128x256xbf16>
    %cst = arith.constant dense<0.000000e+00> : vector<32x256xf32>
    %4 = tpu.matmul %2, %3, %cst {dimension_numbers = #tpu.dot_dimension_numbers<[1], [0], [0], [1], [0, 0, 1, 1], [], []>} : vector<32x128xbf16>, vector<128x256xbf16>, vector<32x256xf32> -> vector<32x256xf32>
    %5 = vector.extract_strided_slice %0 {offsets = [0, 0], sizes = [1, 256], strides = [1, 1]} : vector<4x256xf32> to vector<1x256xf32>
    %6 = vector.broadcast %5 : vector<1x256xf32> to vector<32x256xf32>
    %7 = arith.addf %4, %6 : vector<32x256xf32>
    %cst_6 = arith.constant 0.000000e+00 : f32
    %8 = vector.broadcast %cst_6 : f32 to vector<32x256xf32>
    %9 = arith.maximumf %7, %8 : vector<32x256xf32>
    %10 = arith.truncf %9 : vector<32x256xf32> to vector<32x256xbf16>
    %c0_7 = arith.constant 0 : index
    %c0_8 = arith.constant 0 : index
    %c0_9 = arith.constant 0 : index
    %11 = vector.load %arg5[%c0_7, %c0_8, %c0_9] : memref<3x256x256xbf16, #tpu.memory_space<vmem>>, vector<1x256x256xbf16>
    %12 = vector.shape_cast %11 : vector<1x256x256xbf16> to vector<256x256xbf16>
    %cst_10 = arith.constant dense<0.000000e+00> : vector<32x256xf32>
    %13 = tpu.matmul %10, %12, %cst_10 {dimension_numbers = #tpu.dot_dimension_numbers<[1], [0], [0], [1], [0, 0, 1, 1], [], []>} : vector<32x256xbf16>, vector<256x256xbf16>, vector<32x256xf32> -> vector<32x256xf32>
    %14 = vector.extract_strided_slice %0 {offsets = [1, 0], sizes = [1, 256], strides = [1, 1]} : vector<4x256xf32> to vector<1x256xf32>
    %15 = vector.broadcast %14 : vector<1x256xf32> to vector<32x256xf32>
    %16 = arith.addf %13, %15 : vector<32x256xf32>
    %cst_11 = arith.constant 0.000000e+00 : f32
    %17 = vector.broadcast %cst_11 : f32 to vector<32x256xf32>
    %18 = arith.maximumf %16, %17 : vector<32x256xf32>
    %19 = arith.truncf %18 : vector<32x256xf32> to vector<32x256xbf16>
    %c1 = arith.constant 1 : index
    %c0_12 = arith.constant 0 : index
    %c0_13 = arith.constant 0 : index
    %20 = vector.load %arg5[%c1, %c0_12, %c0_13] : memref<3x256x256xbf16, #tpu.memory_space<vmem>>, vector<1x256x256xbf16>
    %21 = vector.shape_cast %20 : vector<1x256x256xbf16> to vector<256x256xbf16>
    %cst_14 = arith.constant dense<0.000000e+00> : vector<32x256xf32>
    %22 = tpu.matmul %19, %21, %cst_14 {dimension_numbers = #tpu.dot_dimension_numbers<[1], [0], [0], [1], [0, 0, 1, 1], [], []>} : vector<32x256xbf16>, vector<256x256xbf16>, vector<32x256xf32> -> vector<32x256xf32>
    %23 = vector.extract_strided_slice %0 {offsets = [2, 0], sizes = [1, 256], strides = [1, 1]} : vector<4x256xf32> to vector<1x256xf32>
    %24 = vector.broadcast %23 : vector<1x256xf32> to vector<32x256xf32>
    %25 = arith.addf %22, %24 : vector<32x256xf32>
    %cst_15 = arith.constant 0.000000e+00 : f32
    %26 = vector.broadcast %cst_15 : f32 to vector<32x256xf32>
    %27 = arith.maximumf %25, %26 : vector<32x256xf32>
    %28 = arith.truncf %27 : vector<32x256xf32> to vector<32x256xbf16>
    %c2 = arith.constant 2 : index
    %c0_16 = arith.constant 0 : index
    %c0_17 = arith.constant 0 : index
    %29 = vector.load %arg5[%c2, %c0_16, %c0_17] : memref<3x256x256xbf16, #tpu.memory_space<vmem>>, vector<1x256x256xbf16>
    %30 = vector.shape_cast %29 : vector<1x256x256xbf16> to vector<256x256xbf16>
    %cst_18 = arith.constant dense<0.000000e+00> : vector<32x256xf32>
    %31 = tpu.matmul %28, %30, %cst_18 {dimension_numbers = #tpu.dot_dimension_numbers<[1], [0], [0], [1], [0, 0, 1, 1], [], []>} : vector<32x256xbf16>, vector<256x256xbf16>, vector<32x256xf32> -> vector<32x256xf32>
    %32 = vector.extract_strided_slice %0 {offsets = [3, 0], sizes = [1, 256], strides = [1, 1]} : vector<4x256xf32> to vector<1x256xf32>
    %33 = vector.broadcast %32 : vector<1x256xf32> to vector<32x256xf32>
    %34 = arith.addf %31, %33 : vector<32x256xf32>
    %cst_19 = arith.constant 0.000000e+00 : f32
    %35 = vector.broadcast %cst_19 : f32 to vector<32x256xf32>
    %36 = arith.maximumf %34, %35 : vector<32x256xf32>
    %37 = arith.truncf %36 : vector<32x256xf32> to vector<32x256xbf16>
    %c0_20 = arith.constant 0 : index
    %c0_21 = arith.constant 0 : index
    %38 = vector.load %arg7[%c0_20, %c0_21] : memref<256x128xbf16, #tpu.memory_space<vmem>>, vector<256x128xbf16>
    %cst_22 = arith.constant dense<0.000000e+00> : vector<32x128xf32>
    %39 = tpu.matmul %37, %38, %cst_22 {dimension_numbers = #tpu.dot_dimension_numbers<[1], [0], [0], [1], [0, 0, 1, 1], [], []>} : vector<32x256xbf16>, vector<256x128xbf16>, vector<32x128xf32> -> vector<32x128xf32>
    %c0_23 = arith.constant 0 : index
    %c0_24 = arith.constant 0 : index
    %40 = vector.load %arg8[%c0_23, %c0_24] : memref<1x128xf32, #tpu.memory_space<vmem>>, vector<1x128xf32>
    %41 = vector.broadcast %40 : vector<1x128xf32> to vector<32x128xf32>
    %42 = arith.addf %39, %41 : vector<32x128xf32>
    %c0_25 = arith.constant 0 : index
    %c0_26 = arith.constant 0 : index
    %c0_27 = arith.constant 0 : index
    %43 = vector.load %arg3[%c0_25, %c0_26, %c0_27] : memref<1x16x32xbf16, #tpu.memory_space<vmem>>, vector<1x16x32xbf16>
    %44 = vector.shape_cast %43 : vector<1x16x32xbf16> to vector<16x32xbf16>
    %45 = arith.truncf %42 : vector<32x128xf32> to vector<32x128xbf16>
    %cst_28 = arith.constant dense<0.000000e+00> : vector<16x128xf32>
    %46 = tpu.matmul %44, %45, %cst_28 {dimension_numbers = #tpu.dot_dimension_numbers<[1], [0], [0], [1], [0, 0, 1, 1], [], []>} : vector<16x32xbf16>, vector<32x128xbf16>, vector<16x128xf32> -> vector<16x128xf32>
    %47 = arith.truncf %46 : vector<16x128xf32> to vector<16x128xbf16>
    %c0_29 = arith.constant 0 : index
    %c0_30 = arith.constant 0 : index
    %48 = vector.load %arg9[%c0_29, %c0_30] : memref<128x128xbf16, #tpu.memory_space<vmem>>, vector<128x128xbf16>
    %cst_31 = arith.constant dense<0.000000e+00> : vector<16x128xf32>
    %49 = tpu.matmul %47, %48, %cst_31 {dimension_numbers = #tpu.dot_dimension_numbers<[1], [0], [0], [1], [0, 0, 1, 1], [], []>} : vector<16x128xbf16>, vector<128x128xbf16>, vector<16x128xf32> -> vector<16x128xf32>
    %c0_32 = arith.constant 0 : index
    %c0_33 = arith.constant 0 : index
    %c0_34 = arith.constant 0 : index
    %50 = vector.load %arg2[%c0_32, %c0_33, %c0_34] : memref<1x16x128xbf16, #tpu.memory_space<vmem>>, vector<1x16x128xbf16>
    %51 = vector.shape_cast %50 : vector<1x16x128xbf16> to vector<16x128xbf16>
    %c0_35 = arith.constant 0 : index
    %c0_36 = arith.constant 0 : index
    %52 = vector.load %arg10[%c0_35, %c0_36] : memref<128x128xbf16, #tpu.memory_space<vmem>>, vector<128x128xbf16>
    %cst_37 = arith.constant dense<0.000000e+00> : vector<16x128xf32>
    %53 = tpu.matmul %51, %52, %cst_37 {dimension_numbers = #tpu.dot_dimension_numbers<[1], [0], [0], [1], [0, 0, 1, 1], [], []>} : vector<16x128xbf16>, vector<128x128xbf16>, vector<16x128xf32> -> vector<16x128xf32>
    %54 = arith.addf %49, %53 : vector<16x128xf32>
    %c0_38 = arith.constant 0 : index
    %c0_39 = arith.constant 0 : index
    %55 = vector.load %arg11[%c0_38, %c0_39] : memref<1x128xf32, #tpu.memory_space<vmem>>, vector<1x128xf32>
    %56 = vector.broadcast %55 : vector<1x128xf32> to vector<16x128xf32>
    %57 = arith.addf %54, %56 : vector<16x128xf32>
    %cst_40 = arith.constant 0.000000e+00 : f32
    %58 = vector.broadcast %cst_40 : f32 to vector<16x128xf32>
    %59 = arith.maximumf %57, %58 : vector<16x128xf32>
    %60 = arith.truncf %59 : vector<16x128xf32> to vector<16x128xbf16>
    %c0_41 = arith.constant 0 : index
    %c0_42 = arith.constant 0 : index
    %61 = vector.load %arg12[%c0_41, %c0_42] : memref<128x128xbf16, #tpu.memory_space<vmem>>, vector<128x128xbf16>
    %cst_43 = arith.constant dense<0.000000e+00> : vector<16x128xf32>
    %62 = tpu.matmul %60, %61, %cst_43 {dimension_numbers = #tpu.dot_dimension_numbers<[1], [0], [0], [1], [0, 0, 1, 1], [], []>} : vector<16x128xbf16>, vector<128x128xbf16>, vector<16x128xf32> -> vector<16x128xf32>
    %c0_44 = arith.constant 0 : index
    %c0_45 = arith.constant 0 : index
    %63 = vector.load %arg13[%c0_44, %c0_45] : memref<1x128xf32, #tpu.memory_space<vmem>>, vector<1x128xf32>
    %64 = vector.broadcast %63 : vector<1x128xf32> to vector<16x128xf32>
    %65 = arith.addf %62, %64 : vector<16x128xf32>
    %c0_46 = arith.constant 0 : index
    %c0_47 = arith.constant 0 : index
    %c0_48 = arith.constant 0 : index
    %66 = vector.load %arg14[%c0_46, %c0_47, %c0_48] : memref<1x16x128xf32, #tpu.memory_space<vmem>>, vector<1x16x128xf32>
    %67 = vector.shape_cast %66 : vector<1x16x128xf32> to vector<16x128xf32>
    %68 = vector.shape_cast %65 : vector<16x128xf32> to vector<1x16x128xf32>
    tpu.vector_store %arg14[%c0_46, %c0_47, %c0_48], %68 {strides = array<i32>} : memref<1x16x128xf32, #tpu.memory_space<vmem>>, vector<1x16x128xf32>,
    return
  }
  func.func @transform_0(%arg0: i32) -> (i32, i32, i32) {
    %c0_i32 = arith.constant 0 : i32
    %c0_i32_0 = arith.constant 0 : i32
    %c0_i32_1 = arith.constant 0 : i32
    return %arg0, %c0_i32, %c0_i32_0 : i32, i32, i32
  }
  func.func @transform_1(%arg0: i32) -> (i32, i32, i32) {
    %c0_i32 = arith.constant 0 : i32
    %c0_i32_0 = arith.constant 0 : i32
    %c0_i32_1 = arith.constant 0 : i32
    return %arg0, %c0_i32, %c0_i32_0 : i32, i32, i32
  }
  func.func @transform_2(%arg0: i32) -> (i32, i32, i32) {
    %c0_i32 = arith.constant 0 : i32
    %c0_i32_0 = arith.constant 0 : i32
    %c0_i32_1 = arith.constant 0 : i32
    return %arg0, %c0_i32, %c0_i32_0 : i32, i32, i32
  }
  func.func @transform_3(%arg0: i32) -> (i32, i32) {
    %c0_i32 = arith.constant 0 : i32
    %c0_i32_0 = arith.constant 0 : i32
    %c0_i32_1 = arith.constant 0 : i32
    return %c0_i32, %c0_i32_0 : i32, i32
  }
  func.func @transform_4(%arg0: i32) -> (i32, i32, i32) {
    %c0_i32 = arith.constant 0 : i32
    %c0_i32_0 = arith.constant 0 : i32
    %c0_i32_1 = arith.constant 0 : i32
    %c0_i32_2 = arith.constant 0 : i32
    return %c0_i32, %c0_i32_0, %c0_i32_1 : i32, i32, i32
  }
  func.func @transform_5(%arg0: i32) -> (i32, i32) {
    %c0_i32 = arith.constant 0 : i32
    %c0_i32_0 = arith.constant 0 : i32
    %c0_i32_1 = arith.constant 0 : i32
    return %c0_i32, %c0_i32_0 : i32, i32
  }
  func.func @transform_6(%arg0: i32) -> (i32, i32) {
    %c0_i32 = arith.constant 0 : i32
    %c0_i32_0 = arith.constant 0 : i32
    %c0_i32_1 = arith.constant 0 : i32
    return %c0_i32, %c0_i32_0 : i32, i32
  }
  func.func @transform_7(%arg0: i32) -> (i32, i32) {
    %c0_i32 = arith.constant 0 : i32
    %c0_i32_0 = arith.constant 0 : i32
    %c0_i32_1 = arith.constant 0 : i32
    return %c0_i32, %c0_i32_0 : i32, i32
  }
  func.func @transform_8(%arg0: i32) -> (i32, i32) {
    %c0_i32 = arith.constant 0 : i32
    %c0_i32_0 = arith.constant 0 : i32
    %c0_i32_1 = arith.constant 0 : i32
    return %c0_i32, %c0_i32_0 : i32, i32
  }
  func.func @transform_9(%arg0: i32) -> (i32, i32) {
    %c0_i32 = arith.constant 0 : i32
    %c0_i32_0 = arith.constant 0 : i32
    %c0_i32_1 = arith.constant 0 : i32
    return %c0_i32, %c0_i32_0 : i32, i32
  }
  func.func @transform_10(%arg0: i32) -> (i32, i32) {
    %c0_i32 = arith.constant 0 : i32
    %c0_i32_0 = arith.constant 0 : i32
    %c0_i32_1 = arith.constant 0 : i32
    return %c0_i32, %c0_i32_0 : i32, i32
  }
  func.func @transform_11(%arg0: i32) -> (i32, i32) {
    %c0_i32 = arith.constant 0 : i32
    %c0_i32_0 = arith.constant 0 : i32
    %c0_i32_1 = arith.constant 0 : i32
    return %c0_i32, %c0_i32_0 : i32, i32
  }
  func.func @transform_12(%arg0: i32) -> (i32, i32) {
    %c0_i32 = arith.constant 0 : i32
    %c0_i32_0 = arith.constant 0 : i32
    %c0_i32_1 = arith.constant 0 : i32
    return %c0_i32, %c0_i32_0 : i32, i32
  }
  func.func @transform_13(%arg0: i32) -> (i32, i32, i32) {
    %c0_i32 = arith.constant 0 : i32
    %c0_i32_0 = arith.constant 0 : i32
    %c0_i32_1 = arith.constant 0 : i32
    return %arg0, %c0_i32, %c0_i32_0 : i32, i32, i32
  }
}

</mosaic_0001>

<llo_original>
// kernel: tpu_custom_call.1
$region0: #{tpu_custom_call.1}
  #allocation0 [shape = 'u32[]', space=smem, size = 0x4, offset = 0x4, fixed_abs, tag = 'smem constant byte address 0x4 - core index']
  #allocation1 [shape = 'u32[144,128]{1,0:T(1,128)}', space=vmem, size = 0x12000, scoped, tag = 'internal scratch']
  %s0 = inlined_call_operand.hbm [shape: bf16[2,32,128], index: 0, kind: input, shape index: {}]
  %s1 = inlined_call_operand.hbm [shape: bf16[2,16,128], index: 1, kind: input, shape index: {}]
  %s2 = inlined_call_operand.hbm [shape: bf16[2,16,32], index: 2, kind: input, shape index: {}]
  %s3 = inlined_call_operand.hbm [shape: bf16[128,256], index: 3, kind: input, shape index: {}]
  %s4 = inlined_call_operand.hbm [shape: bf16[3,256,256], index: 4, kind: input, shape index: {}]
  %s5 = inlined_call_operand.vmem [shape: f32[4,256], index: 5, kind: input, shape index: {}]
  %s6 = inlined_call_operand.hbm [shape: bf16[256,128], index: 6, kind: input, shape index: {}]
  %s7 = inlined_call_operand.vmem [shape: f32[1,128], index: 7, kind: input, shape index: {}]
  %s8 = inlined_call_operand.hbm [shape: bf16[128,128], index: 8, kind: input, shape index: {}]
  %s9 = inlined_call_operand.hbm [shape: bf16[128,128], index: 9, kind: input, shape index: {}]
  %s10 = inlined_call_operand.vmem [shape: f32[1,128], index: 10, kind: input, shape index: {}]
  %s11 = inlined_call_operand.hbm [shape: bf16[128,128], index: 11, kind: input, shape index: {}]
  %s12 = inlined_call_operand.vmem [shape: f32[1,128], index: 12, kind: input, shape index: {}]
  %s13 = inlined_call_operand.hbm [shape: f32[2,16,128], index: 13, kind: output, shape index: {}]
  %s14 = sld [smem:[#allocation0]]
  $region121: #{tpu_custom_call.1} parent=0
    _
  %s16 = ssub.s32 1, %s14
  %s17 = scalar_select 0, %s16, %s14
  $region1: #{tpu_custom_call.1} parent=0
    #allocation2 [shape = 'u8[16384]{0}', space=vmem, size = 0x4000, scoped, tag = 'input window, operand 0']
    #allocation3 [shape = 's32[2]{0}', space=sflag, size = 0x8, scoped, tag = 'scoped memory for tpu_custom_call.1']
    #allocation4 [shape = 's32[2]{0}', space=sflag, size = 0x8, scoped, tag = 'scoped memory for tpu_custom_call.1']
    #allocation5 [shape = 'u8[8192]{0}', space=vmem, size = 0x2000, scoped, tag = 'input window, operand 1']
    #allocation6 [shape = 's32[2]{0}', space=sflag, size = 0x8, scoped, tag = 'scoped memory for tpu_custom_call.1']
    #allocation7 [shape = 'u8[8192]{0}', space=vmem, size = 0x2000, scoped, tag = 'input window, operand 2']
    #allocation8 [shape = 'u8[65536]{0}', space=vmem, size = 0x10000, scoped, tag = 'input window, operand 3, single buffered']
    #allocation9 [shape = 's32[1]{0}', space=sflag, size = 0x4, scoped, tag = 'scoped memory for tpu_custom_call.1']
    #allocation10 [shape = 'u8[393216]{0}', space=vmem, size = 0x60000, scoped, tag = 'input window, operand 4, single buffered']
    #allocation11 [shape = 'u8[65536]{0}', space=vmem, size = 0x10000, scoped, tag = 'input window, operand 6, single buffered']
    #allocation12 [shape = 's32[1]{0}', space=sflag, size = 0x4, scoped, tag = 'scoped memory for tpu_custom_call.1']
    #allocation13 [shape = 'u8[32768]{0}', space=vmem, size = 0x8000, scoped, tag = 'input window, operand 8, single buffered']
    #allocation14 [shape = 'u8[32768]{0}', space=vmem, size = 0x8000, scoped, tag = 'input window, operand 9, single buffered']
    #allocation15 [shape = 's32[1]{0}', space=sflag, size = 0x4, scoped, tag = 'scoped memory for tpu_custom_call.1']
    #allocation16 [shape = 'u8[32768]{0}', space=vmem, size = 0x8000, scoped, tag = 'input window, operand 11, single buffered']
    #allocation17 [shape = 'u8[16384]{0}', space=vmem, size = 0x4000, scoped, tag = 'output window, operand 0']
    %18 = vsyncpa [#allocation3], 0
    %s19 = scalar_lea.sflag [#allocation3], 1
    %20 = vsyncpa %s19, 0
    %21 = vsyncpa [#allocation6], 0
    %s22 = scalar_lea.sflag [#allocation6], 1
    %23 = vsyncpa %s22, 0
    %24 = vsyncpa [#allocation9], 0
    %25 = vsyncpa [#allocation12], 0
    %26 = vsyncpa [#allocation15], 0
    %27 = vsyncpa [#allocation4], 0
    %s28 = scalar_lea.sflag [#allocation4], 1
    %29 = vsyncpa %s28, 0
    loop: start=0, step=1, limit=4
    $region2: #{tpu_custom_call.1} parent=1 // loop_pre_header
      _
    $region3: #{tpu_custom_call.1} parent=1 // loop_header
      %s31 = sphi 0, %s35
      %p32 = scmp.ge.s32.totalorder %s31, 4
      %s41 = sphi 0, %s43
      %s44 = sphi 0, %s41
      %s45 = sphi 0, %s44
      %s61 = sphi 0, %s45
      %s67 = sphi 0, %s69
      %s70 = sphi 0, %s67
      %s71 = sphi 0, %s70
      %s87 = sphi 0, %s71
      %s93 = sphi 0, %s95
      %s96 = sphi 0, %s93
      %s97 = sphi 0, %s96
      %s113 = sphi 0, %s97
      %s117 = sphi 0, %s117
      %s119 = sphi 0, %s117
      %s120 = sphi 0, %s119
      %s134 = sphi 0, %s120
      %s138 = sphi 0, %s138
      %s140 = sphi 0, %s138
      %s141 = sphi 0, %s140
      %s155 = sphi 0, %s141
      %s159 = sphi 0, %s159
      %s161 = sphi 0, %s159
      %s162 = sphi 0, %s161
      %s176 = sphi 0, %s162
      %s180 = sphi 0, %s180
      %s182 = sphi 0, %s180
      %s183 = sphi 0, %s182
      %s197 = sphi 0, %s183
      %s201 = sphi 0, %s201
      %s203 = sphi 0, %s201
      %s204 = sphi 0, %s203
      %s218 = sphi 0, %s204
      %s222 = sphi 0, %s222
      %s224 = sphi 0, %s222
      %s225 = sphi 0, %s224
      %s239 = sphi 0, %s225
      %s243 = sphi 0, %s243
      %s245 = sphi 0, %s243
      %s246 = sphi 0, %s245
      %s260 = sphi 0, %s246
      %s264 = sphi 0, %s264
      %s266 = sphi 0, %s264
      %s267 = sphi 0, %s266
      %s281 = sphi 0, %s267
      %s285 = sphi 0, %s285
      %s287 = sphi 0, %s285
      %s288 = sphi 0, %s287
      %s302 = sphi 0, %s288
      %s306 = sphi 0, %s306
      %s308 = sphi 0, %s306
      %s309 = sphi 0, %s308
      %s323 = sphi 0, %s309
      %s329 = sphi 0, %s331
      %s332 = sphi 0, %s329
      %s333 = sphi 0, %s332
      %s349 = sphi 0, %s333
    $region4: #{tpu_custom_call.1} parent=1 // loop_header_branch
      %34 = sbr.rel (%p32) target = $region8
    $region5: #{tpu_custom_call.1} parent=1 // loop_body
      %s36 = ssub.s32 %s31, 1
      %s37 = ssub.s32 %s31, 2
      %s38 = sadd.s32 %s31, 1
      %s39 = ssub.s32 %s31, %s38
      %p40 = scmp.eq.s32.totalorder %s39, 0
      %s42 = sadd.s32 %s41, 1
      %s43 = scalar_select %p40, %s41, %s42
      %p46 = pneg %p40
      %p47 = scmp.eq.s32.totalorder %s31, 1
      %p48 = por %p46, %p47
      %p49 = scmp.ne.s32.totalorder %s41, %s44
      %p50 = scmp.eq.s32.totalorder %s31, 0
      %p51 = por %p49, %p50
      %p52 = scmp.ne.s32.totalorder %s41, %s44
      %p53 = scmp.eq.s32.totalorder %s36, 1
      %p54 = por %p52, %p53
      %p55 = scmp.ne.s32.totalorder %s44, %s45
      %p56 = scmp.eq.s32.totalorder %s36, 0
      %p57 = por %p55, %p56
      %p58 = scmp.ne.s32.totalorder %s44, %s45
      %p59 = scmp.eq.s32.totalorder %s37, 1
      %p60 = por %p58, %p59
      %p62 = scmp.ne.s32.totalorder %s45, %s61
      %p63 = scmp.eq.s32.totalorder %s37, 0
      %p64 = por %p62, %p63
      %s65 = ssub.s32 %s31, %s38
      %p66 = scmp.eq.s32.totalorder %s65, 0
      %s68 = sadd.s32 %s67, 1
      %s69 = scalar_select %p66, %s67, %s68
      %p72 = pneg %p66
      %p73 = scmp.eq.s32.totalorder %s31, 1
      %p74 = por %p72, %p73
      %p75 = scmp.ne.s32.totalorder %s67, %s70
      %p76 = scmp.eq.s32.totalorder %s31, 0
      %p77 = por %p75, %p76
      %p78 = scmp.ne.s32.totalorder %s67, %s70
      %p79 = scmp.eq.s32.totalorder %s36, 1
      %p80 = por %p78, %p79
      %p81 = scmp.ne.s32.totalorder %s70, %s71
      %p82 = scmp.eq.s32.totalorder %s36, 0
      %p83 = por %p81, %p82
      %p84 = scmp.ne.s32.totalorder %s70, %s71
      %p85 = scmp.eq.s32.totalorder %s37, 1
      %p86 = por %p84, %p85
      %p88 = scmp.ne.s32.totalorder %s71, %s87
      %p89 = scmp.eq.s32.totalorder %s37, 0
      %p90 = por %p88, %p89
      %s91 = ssub.s32 %s31, %s38
      %p92 = scmp.eq.s32.totalorder %s91, 0
      %s94 = sadd.s32 %s93, 1
      %s95 = scalar_select %p92, %s93, %s94
      %p98 = pneg %p92
      %p99 = scmp.eq.s32.totalorder %s31, 1
      %p100 = por %p98, %p99
      %p101 = scmp.ne.s32.totalorder %s93, %s96
      %p102 = scmp.eq.s32.totalorder %s31, 0
      %p103 = por %p101, %p102
      %p104 = scmp.ne.s32.totalorder %s93, %s96
      %p105 = scmp.eq.s32.totalorder %s36, 1
      %p106 = por %p104, %p105
      %p107 = scmp.ne.s32.totalorder %s96, %s97
      %p108 = scmp.eq.s32.totalorder %s36, 0
      %p109 = por %p107, %p108
      %p110 = scmp.ne.s32.totalorder %s96, %s97
      %p111 = scmp.eq.s32.totalorder %s37, 1
      %p112 = por %p110, %p111
      %p114 = scmp.ne.s32.totalorder %s97, %s113
      %p115 = scmp.eq.s32.totalorder %s37, 0
      %p116 = por %p114, %p115
      %s118 = sadd.s32 %s117, 1
      %p121 = scmp.eq.s32.totalorder %s31, 1
      %p122 = scmp.ne.s32.totalorder %s117, %s119
      %p123 = scmp.eq.s32.totalorder %s31, 0
      %p124 = por %p122, %p123
      %p125 = scmp.ne.s32.totalorder %s117, %s119
      %p126 = scmp.eq.s32.totalorder %s36, 1
      %p127 = por %p125, %p126
      %p128 = scmp.ne.s32.totalorder %s119, %s120
      %p129 = scmp.eq.s32.totalorder %s36, 0
      %p130 = por %p128, %p129
      %p131 = scmp.ne.s32.totalorder %s119, %s120
      %p132 = scmp.eq.s32.totalorder %s37, 1
      %p133 = por %p131, %p132
      %p135 = scmp.ne.s32.totalorder %s120, %s134
      %p136 = scmp.eq.s32.totalorder %s37, 0
      %p137 = por %p135, %p136
      %s139 = sadd.s32 %s138, 1
      %p142 = scmp.eq.s32.totalorder %s31, 1
      %p143 = scmp.ne.s32.totalorder %s138, %s140
      %p144 = scmp.eq.s32.totalorder %s31, 0
      %p145 = por %p143, %p144
      %p146 = scmp.ne.s32.totalorder %s138, %s140
      %p147 = scmp.eq.s32.totalorder %s36, 1
      %p148 = por %p146, %p147
      %p149 = scmp.ne.s32.totalorder %s140, %s141
      %p150 = scmp.eq.s32.totalorder %s36, 0
      %p151 = por %p149, %p150
      %p152 = scmp.ne.s32.totalorder %s140, %s141
      %p153 = scmp.eq.s32.totalorder %s37, 1
      %p154 = por %p152, %p153
      %p156 = scmp.ne.s32.totalorder %s141, %s155
      %p157 = scmp.eq.s32.totalorder %s37, 0
      %p158 = por %p156, %p157
      %s160 = sadd.s32 %s159, 1
      %p163 = scmp.eq.s32.totalorder %s31, 1
      %p164 = scmp.ne.s32.totalorder %s159, %s161
      %p165 = scmp.eq.s32.totalorder %s31, 0
      %p166 = por %p164, %p165
      %p167 = scmp.ne.s32.totalorder %s159, %s161
      %p168 = scmp.eq.s32.totalorder %s36, 1
      %p169 = por %p167, %p168
      %p170 = scmp.ne.s32.totalorder %s161, %s162
      %p171 = scmp.eq.s32.totalorder %s36, 0
      %p172 = por %p170, %p171
      %p173 = scmp.ne.s32.totalorder %s161, %s162
      %p174 = scmp.eq.s32.totalorder %s37, 1
      %p175 = por %p173, %p174
      %p177 = scmp.ne.s32.totalorder %s162, %s176
      %p178 = scmp.eq.s32.totalorder %s37, 0
      %p179 = por %p177, %p178
      %s181 = sadd.s32 %s180, 1
      %p184 = scmp.eq.s32.totalorder %s31, 1
      %p185 = scmp.ne.s32.totalorder %s180, %s182
      %p186 = scmp.eq.s32.totalorder %s31, 0
      %p187 = por %p185, %p186
      %p188 = scmp.ne.s32.totalorder %s180, %s182
      %p189 = scmp.eq.s32.totalorder %s36, 1
      %p190 = por %p188, %p189
      %p191 = scmp.ne.s32.totalorder %s182, %s183
      %p192 = scmp.eq.s32.totalorder %s36, 0
      %p193 = por %p191, %p192
      %p194 = scmp.ne.s32.totalorder %s182, %s183
      %p195 = scmp.eq.s32.totalorder %s37, 1
      %p196 = por %p194, %p195
      %p198 = scmp.ne.s32.totalorder %s183, %s197
      %p199 = scmp.eq.s32.totalorder %s37, 0
      %p200 = por %p198, %p199
      %s202 = sadd.s32 %s201, 1
      %p205 = scmp.eq.s32.totalorder %s31, 1
      %p206 = scmp.ne.s32.totalorder %s201, %s203
      %p207 = scmp.eq.s32.totalorder %s31, 0
      %p208 = por %p206, %p207
      %p209 = scmp.ne.s32.totalorder %s201, %s203
      %p210 = scmp.eq.s32.totalorder %s36, 1
      %p211 = por %p209, %p210
      %p212 = scmp.ne.s32.totalorder %s203, %s204
      %p213 = scmp.eq.s32.totalorder %s36, 0
      %p214 = por %p212, %p213
      %p215 = scmp.ne.s32.totalorder %s203, %s204
      %p216 = scmp.eq.s32.totalorder %s37, 1
      %p217 = por %p215, %p216
      %p219 = scmp.ne.s32.totalorder %s204, %s218
      %p220 = scmp.eq.s32.totalorder %s37, 0
      %p221 = por %p219, %p220
      %s223 = sadd.s32 %s222, 1
      %p226 = scmp.eq.s32.totalorder %s31, 1
      %p227 = scmp.ne.s32.totalorder %s222, %s224
      %p228 = scmp.eq.s32.totalorder %s31, 0
      %p229 = por %p227, %p228
      %p230 = scmp.ne.s32.totalorder %s222, %s224
      %p231 = scmp.eq.s32.totalorder %s36, 1
      %p232 = por %p230, %p231
      %p233 = scmp.ne.s32.totalorder %s224, %s225
      %p234 = scmp.eq.s32.totalorder %s36, 0
      %p235 = por %p233, %p234
      %p236 = scmp.ne.s32.totalorder %s224, %s225
      %p237 = scmp.eq.s32.totalorder %s37, 1
      %p238 = por %p236, %p237
      %p240 = scmp.ne.s32.totalorder %s225, %s239
      %p241 = scmp.eq.s32.totalorder %s37, 0
      %p242 = por %p240, %p241
      %s244 = sadd.s32 %s243, 1
      %p247 = scmp.eq.s32.totalorder %s31, 1
      %p248 = scmp.ne.s32.totalorder %s243, %s245
      %p249 = scmp.eq.s32.totalorder %s31, 0
      %p250 = por %p248, %p249
      %p251 = scmp.ne.s32.totalorder %s243, %s245
      %p252 = scmp.eq.s32.totalorder %s36, 1
      %p253 = por %p251, %p252
      %p254 = scmp.ne.s32.totalorder %s245, %s246
      %p255 = scmp.eq.s32.totalorder %s36, 0
      %p256 = por %p254, %p255
      %p257 = scmp.ne.s32.totalorder %s245, %s246
      %p258 = scmp.eq.s32.totalorder %s37, 1
      %p259 = por %p257, %p258
      %p261 = scmp.ne.s32.totalorder %s246, %s260
      %p262 = scmp.eq.s32.totalorder %s37, 0
      %p263 = por %p261, %p262
      %s265 = sadd.s32 %s264, 1
      %p268 = scmp.eq.s32.totalorder %s31, 1
      %p269 = scmp.ne.s32.totalorder %s264, %s266
      %p270 = scmp.eq.s32.totalorder %s31, 0
      %p271 = por %p269, %p270
      %p272 = scmp.ne.s32.totalorder %s264, %s266
      %p273 = scmp.eq.s32.totalorder %s36, 1
      %p274 = por %p272, %p273
      %p275 = scmp.ne.s32.totalorder %s266, %s267
      %p276 = scmp.eq.s32.totalorder %s36, 0
      %p277 = por %p275, %p276
      %p278 = scmp.ne.s32.totalorder %s266, %s267
      %p279 = scmp.eq.s32.totalorder %s37, 1
      %p280 = por %p278, %p279
      %p282 = scmp.ne.s32.totalorder %s267, %s281
      %p283 = scmp.eq.s32.totalorder %s37, 0
      %p284 = por %p282, %p283
      %s286 = sadd.s32 %s285, 1
      %p289 = scmp.eq.s32.totalorder %s31, 1
      %p290 = scmp.ne.s32.totalorder %s285, %s287
      %p291 = scmp.eq.s32.totalorder %s31, 0
      %p292 = por %p290, %p291
      %p293 = scmp.ne.s32.totalorder %s285, %s287
      %p294 = scmp.eq.s32.totalorder %s36, 1
      %p295 = por %p293, %p294
      %p296 = scmp.ne.s32.totalorder %s287, %s288
      %p297 = scmp.eq.s32.totalorder %s36, 0
      %p298 = por %p296, %p297
      %p299 = scmp.ne.s32.totalorder %s287, %s288
      %p300 = scmp.eq.s32.totalorder %s37, 1
      %p301 = por %p299, %p300
      %p303 = scmp.ne.s32.totalorder %s288, %s302
      %p304 = scmp.eq.s32.totalorder %s37, 0
      %p305 = por %p303, %p304
      %s307 = sadd.s32 %s306, 1
      %p310 = scmp.eq.s32.totalorder %s31, 1
      %p311 = scmp.ne.s32.totalorder %s306, %s308
      %p312 = scmp.eq.s32.totalorder %s31, 0
      %p313 = por %p311, %p312
      %p314 = scmp.ne.s32.totalorder %s306, %s308
      %p315 = scmp.eq.s32.totalorder %s36, 1
      %p316 = por %p314, %p315
      %p317 = scmp.ne.s32.totalorder %s308, %s309
      %p318 = scmp.eq.s32.totalorder %s36, 0
      %p319 = por %p317, %p318
      %p320 = scmp.ne.s32.totalorder %s308, %s309
      %p321 = scmp.eq.s32.totalorder %s37, 1
      %p322 = por %p320, %p321
      %p324 = scmp.ne.s32.totalorder %s309, %s323
      %p325 = scmp.eq.s32.totalorder %s37, 0
      %p326 = por %p324, %p325
      %s327 = ssub.s32 %s31, %s38
      %p328 = scmp.eq.s32.totalorder %s327, 0
      %s330 = sadd.s32 %s329, 1
      %s331 = scalar_select %p328, %s329, %s330
      %p334 = pneg %p328
      %p335 = scmp.eq.s32.totalorder %s31, 1
      %p336 = por %p334, %p335
      %p337 = scmp.ne.s32.totalorder %s329, %s332
      %p338 = scmp.eq.s32.totalorder %s31, 0
      %p339 = por %p337, %p338
      %p340 = scmp.ne.s32.totalorder %s329, %s332
      %p341 = scmp.eq.s32.totalorder %s36, 1
      %p342 = por %p340, %p341
      %p343 = scmp.ne.s32.totalorder %s332, %s333
      %p344 = scmp.eq.s32.totalorder %s36, 0
      %p345 = por %p343, %p344
      %p346 = scmp.ne.s32.totalorder %s332, %s333
      %p347 = scmp.eq.s32.totalorder %s37, 1
      %p348 = por %p346, %p347
      %p350 = scmp.ne.s32.totalorder %s333, %s349
      %p351 = scmp.eq.s32.totalorder %s37, 0
      %p352 = por %p350, %p351
      %p353 = scmp.le.s32.totalorder 1, %s31
      %p354 = scmp.lt.s32.totalorder %s31, 3
      %p355 = pnand %p353, %p354
      %p356 = pneg %p355
      // Predicated region
      $region9: #{tpu_custom_call.1} parent=5 // pred_check
        _
      $region10: #{tpu_custom_call.1} parent=5 // pred_check_branch
        %358 = sbr.rel (%p355) target = $region12
      $region11: #{tpu_custom_call.1} parent=5 // pred_region
        %s359 = ssub.s32 %s31, 1
        // Predicated region
        $region13: #{tpu_custom_call.1} parent=11 // pred_check
          %p360 = pneg %p130
        $region14: #{tpu_custom_call.1} parent=11 // pred_check_branch
          %362 = sbr.rel (%p360) target = $region16
        $region15: #{tpu_custom_call.1} parent=11 // pred_region
          %s364 = ssub.s32 2048, 2048
          %365 = vsyncadd [#allocation9], %s364
          %s366 = sshll.u32 [#allocation8], 4
          %s367 = int_to_ptr.vmem [resolvable:$true] %s366
          %372 = dma.hbm_to_vmem [thread:$0]  %s3, 2048, %s367, [#allocation9], 128, 128, 8
        $region16: #{tpu_custom_call.1} parent=11 // pred_fallthru
          _
        // Predicated region
        $region17: #{tpu_custom_call.1} parent=11 // pred_check
          %p373 = pneg %p151
        $region18: #{tpu_custom_call.1} parent=11 // pred_check_branch
          %375 = sbr.rel (%p373) target = $region20
        $region19: #{tpu_custom_call.1} parent=11 // pred_region
          %s377 = ssub.s32 12288, 12288
          %378 = vsyncadd [#allocation9], %s377
          %s379 = sshll.u32 [#allocation10], 4
          %s380 = int_to_ptr.vmem [resolvable:$true] %s379
          %385 = dma.hbm_to_vmem [thread:$0]  %s4, 12288, %s380, [#allocation9], 128, 128, 8
        $region20: #{tpu_custom_call.1} parent=11 // pred_fallthru
          _
        // Predicated region
        $region21: #{tpu_custom_call.1} parent=11 // pred_check
          %p386 = pneg %p172
        $region22: #{tpu_custom_call.1} parent=11 // pred_check_branch
          %388 = sbr.rel (%p386) target = $region24
        $region23: #{tpu_custom_call.1} parent=11 // pred_region
          _
        $region24: #{tpu_custom_call.1} parent=11 // pred_fallthru
          _
        // Predicated region
        $region25: #{tpu_custom_call.1} parent=11 // pred_check
          %p389 = pneg %p193
        $region26: #{tpu_custom_call.1} parent=11 // pred_check_branch
          %391 = sbr.rel (%p389) target = $region28
        $region27: #{tpu_custom_call.1} parent=11 // pred_region
          %s393 = ssub.s32 2048, 2048
          %394 = vsyncadd [#allocation12], %s393
          %s395 = sshll.u32 [#allocation11], 4
          %s396 = int_to_ptr.vmem [resolvable:$true] %s395
          %401 = dma.hbm_to_vmem [thread:$0]  %s6, 2048, %s396, [#allocation12], 64, 64, 4
        $region28: #{tpu_custom_call.1} parent=11 // pred_fallthru
          _
        // Predicated region
        $region29: #{tpu_custom_call.1} parent=11 // pred_check
          %p402 = pneg %p214
        $region30: #{tpu_custom_call.1} parent=11 // pred_check_branch
          %404 = sbr.rel (%p402) target = $region32
        $region31: #{tpu_custom_call.1} parent=11 // pred_region
          _
        $region32: #{tpu_custom_call.1} parent=11 // pred_fallthru
          _
        // Predicated region
        $region33: #{tpu_custom_call.1} parent=11 // pred_check
          %p405 = pneg %p235
        $region34: #{tpu_custom_call.1} parent=11 // pred_check_branch
          %407 = sbr.rel (%p405) target = $region36
        $region35: #{tpu_custom_call.1} parent=11 // pred_region
          %s409 = ssub.s32 1024, 1024
          %410 = vsyncadd [#allocation12], %s409
          %s411 = sshll.u32 [#allocation13], 4
          %s412 = int_to_ptr.vmem [resolvable:$true] %s411
          %417 = dma.hbm_to_vmem [thread:$0]  %s8, 1024, %s412, [#allocation12], 64, 64, 4
        $region36: #{tpu_custom_call.1} parent=11 // pred_fallthru
          _
        // Predicated region
        $region37: #{tpu_custom_call.1} parent=11 // pred_check
          %p418 = pneg %p256
        $region38: #{tpu_custom_call.1} parent=11 // pred_check_branch
          %420 = sbr.rel (%p418) target = $region40
        $region39: #{tpu_custom_call.1} parent=11 // pred_region
          %s422 = ssub.s32 1024, 1024
          %423 = vsyncadd [#allocation15], %s422
          %s424 = sshll.u32 [#allocation14], 4
          %s425 = int_to_ptr.vmem [resolvable:$true] %s424
          %430 = dma.hbm_to_vmem [thread:$0]  %s9, 1024, %s425, [#allocation15], 64, 64, 4
        $region40: #{tpu_custom_call.1} parent=11 // pred_fallthru
          _
        // Predicated region
        $region41: #{tpu_custom_call.1} parent=11 // pred_check
          %p431 = pneg %p277
        $region42: #{tpu_custom_call.1} parent=11 // pred_check_branch
          %433 = sbr.rel (%p431) target = $region44
        $region43: #{tpu_custom_call.1} parent=11 // pred_region
          _
        $region44: #{tpu_custom_call.1} parent=11 // pred_fallthru
          _
        // Predicated region
        $region45: #{tpu_custom_call.1} parent=11 // pred_check
          %p434 = pneg %p298
        $region46: #{tpu_custom_call.1} parent=11 // pred_check_branch
          %436 = sbr.rel (%p434) target = $region48
        $region47: #{tpu_custom_call.1} parent=11 // pred_region
          %s438 = ssub.s32 1024, 1024
          %439 = vsyncadd [#allocation15], %s438
          %s440 = sshll.u32 [#allocation16], 4
          %s441 = int_to_ptr.vmem [resolvable:$true] %s440
          %446 = dma.hbm_to_vmem [thread:$0]  %s11, 1024, %s441, [#allocation15], 64, 64, 4
        $region48: #{tpu_custom_call.1} parent=11 // pred_fallthru
          _
        // Predicated region
        $region49: #{tpu_custom_call.1} parent=11 // pred_check
          %p447 = pneg %p319
        $region50: #{tpu_custom_call.1} parent=11 // pred_check_branch
          %449 = sbr.rel (%p447) target = $region52
        $region51: #{tpu_custom_call.1} parent=11 // pred_region
          _
        $region52: #{tpu_custom_call.1} parent=11 // pred_fallthru
          _
      $region12: #{tpu_custom_call.1} parent=5 // pred_fallthru
        _
      %p450 = scmp.lt.s32.totalorder %s31, 2
      // Predicated region
      $region53: #{tpu_custom_call.1} parent=5 // pred_check
        %p451 = pneg %p450
      $region54: #{tpu_custom_call.1} parent=5 // pred_check_branch
        %453 = sbr.rel (%p451) target = $region56
      $region55: #{tpu_custom_call.1} parent=5 // pred_region
        // Predicated region
        $region57: #{tpu_custom_call.1} parent=55 // pred_check
          %p454 = pneg %p51
        $region58: #{tpu_custom_call.1} parent=55 // pred_check_branch
          %456 = sbr.rel (%p454) target = $region60
        $region59: #{tpu_custom_call.1} parent=55 // pred_region
          %s457 = sand.u32 %s41, 1
          %s458 = scalar_lea.sflag [#allocation3], %s457
          %s459 = sand.u32 %s41, 1
          %s460 = smul.addr %s459, 16
          %s461 = scalar_lea.vmem [#allocation2], %s460
          %s463 = ssub.s32 256, 256
          %464 = vsyncadd %s458, %s463
          %s465 = smul.addr %s31, 4
          %s466 = smul.addr %s465, 64
          %s467 = scalar_lea.hbm %s0, %s466
          %s468 = sshll.u32 %s461, 4
          %s469 = int_to_ptr.vmem [resolvable:$true] %s468
          %474 = dma.hbm_to_vmem [thread:$0]  %s467, 256, %s469, %s458, 64, 64, 4
        $region60: #{tpu_custom_call.1} parent=55 // pred_fallthru
          _
        // Predicated region
        $region61: #{tpu_custom_call.1} parent=55 // pred_check
          %p475 = pneg %p77
        $region62: #{tpu_custom_call.1} parent=55 // pred_check_branch
          %477 = sbr.rel (%p475) target = $region64
        $region63: #{tpu_custom_call.1} parent=55 // pred_region
          %s478 = sand.u32 %s31, 1
          %s479 = scalar_lea.sflag [#allocation6], %s478
          %s480 = sand.u32 %s67, 1
          %s481 = smul.addr %s480, 8
          %s482 = scalar_lea.vmem [#allocation5], %s481
          %s484 = ssub.s32 128, 128
          %485 = vsyncadd %s479, %s484
          %s486 = smul.addr %s31, 2
          %s487 = smul.addr %s486, 64
          %s488 = scalar_lea.hbm %s1, %s487
          %s489 = sshll.u32 %s482, 4
          %s490 = int_to_ptr.vmem [resolvable:$true] %s489
          %495 = dma.hbm_to_vmem [thread:$0]  %s488, 128, %s490, %s479, 64, 64, 4
        $region64: #{tpu_custom_call.1} parent=55 // pred_fallthru
          _
        // Predicated region
        $region65: #{tpu_custom_call.1} parent=55 // pred_check
          %p496 = pneg %p103
        $region66: #{tpu_custom_call.1} parent=55 // pred_check_branch
          %498 = sbr.rel (%p496) target = $region68
        $region67: #{tpu_custom_call.1} parent=55 // pred_region
          %s499 = sand.u32 %s31, 1
          %s500 = scalar_lea.sflag [#allocation6], %s499
          %s501 = sand.u32 %s93, 1
          %s502 = smul.addr %s501, 8
          %s503 = scalar_lea.vmem [#allocation7], %s502
          %s505 = ssub.s32 128, 128
          %506 = vsyncadd %s500, %s505
          %s507 = smul.addr %s31, 2
          %s508 = smul.addr %s507, 64
          %s509 = scalar_lea.hbm %s2, %s508
          %s510 = sshll.u32 %s503, 4
          %s511 = int_to_ptr.vmem [resolvable:$true] %s510
          %516 = dma.hbm_to_vmem [thread:$0]  %s509, 128, %s511, %s500, 64, 64, 4
        $region68: #{tpu_custom_call.1} parent=55 // pred_fallthru
          _
      $region56: #{tpu_custom_call.1} parent=5 // pred_fallthru
        _
      %p517 = scmp.le.s32.totalorder 1, %s31
      %p518 = scmp.lt.s32.totalorder %s31, 3
      %p519 = pnand %p517, %p518
      %p520 = pneg %p519
      // Predicated region
      $region69: #{tpu_custom_call.1} parent=5 // pred_check
        _
      $region70: #{tpu_custom_call.1} parent=5 // pred_check_branch
        %522 = sbr.rel (%p519) target = $region72
      $region71: #{tpu_custom_call.1} parent=5 // pred_region
        %s523 = ssub.s32 %s31, 1
        %s524 = sand.u32 %s44, 1
        %s525 = scalar_lea.sflag [#allocation3], %s524
        %s526 = sand.u32 %s44, 1
        %s527 = smul.addr %s526, 16
        %s528 = scalar_lea.vmem [#allocation2], %s527
        // Predicated region
        $region73: #{tpu_custom_call.1} parent=71 // pred_check
          %p529 = pneg %p57
        $region74: #{tpu_custom_call.1} parent=71 // pred_check_branch
          %531 = sbr.rel (%p529) target = $region76
        $region75: #{tpu_custom_call.1} parent=71 // pred_region
          %532 = dma.done %s525, 256
        $region76: #{tpu_custom_call.1} parent=71 // pred_fallthru
          _
        %s533 = sand.u32 %s36, 1
        %s534 = scalar_lea.sflag [#allocation6], %s533
        %s535 = sand.u32 %s70, 1
        %s536 = smul.addr %s535, 8
        %s537 = scalar_lea.vmem [#allocation5], %s536
        // Predicated region
        $region77: #{tpu_custom_call.1} parent=71 // pred_check
          %p538 = pneg %p83
        $region78: #{tpu_custom_call.1} parent=71 // pred_check_branch
          %540 = sbr.rel (%p538) target = $region80
        $region79: #{tpu_custom_call.1} parent=71 // pred_region
          %541 = dma.done %s534, 128
        $region80: #{tpu_custom_call.1} parent=71 // pred_fallthru
          _
        %s542 = sand.u32 %s36, 1
        %s543 = scalar_lea.sflag [#allocation6], %s542
        %s544 = sand.u32 %s96, 1
        %s545 = smul.addr %s544, 8
        %s546 = scalar_lea.vmem [#allocation7], %s545
        // Predicated region
        $region81: #{tpu_custom_call.1} parent=71 // pred_check
          %p547 = pneg %p109
        $region82: #{tpu_custom_call.1} parent=71 // pred_check_branch
          %549 = sbr.rel (%p547) target = $region84
        $region83: #{tpu_custom_call.1} parent=71 // pred_region
          %550 = dma.done %s543, 128
        $region84: #{tpu_custom_call.1} parent=71 // pred_fallthru
          _
        // Predicated region
        $region85: #{tpu_custom_call.1} parent=71 // pred_check
          %p551 = pneg %p130
        $region86: #{tpu_custom_call.1} parent=71 // pred_check_branch
          %553 = sbr.rel (%p551) target = $region88
        $region87: #{tpu_custom_call.1} parent=71 // pred_region
          %554 = dma.done [#allocation9], 2048
        $region88: #{tpu_custom_call.1} parent=71 // pred_fallthru
          _
        // Predicated region
        $region89: #{tpu_custom_call.1} parent=71 // pred_check
          %p555 = pneg %p151
        $region90: #{tpu_custom_call.1} parent=71 // pred_check_branch
          %557 = sbr.rel (%p555) target = $region92
        $region91: #{tpu_custom_call.1} parent=71 // pred_region
          %558 = dma.done [#allocation9], 12288
        $region92: #{tpu_custom_call.1} parent=71 // pred_fallthru
          _
        // Predicated region
        $region93: #{tpu_custom_call.1} parent=71 // pred_check
          %p559 = pneg %p193
        $region94: #{tpu_custom_call.1} parent=71 // pred_check_branch
          %561 = sbr.rel (%p559) target = $region96
        $region95: #{tpu_custom_call.1} parent=71 // pred_region
          %562 = dma.done [#allocation12], 2048
        $region96: #{tpu_custom_call.1} parent=71 // pred_fallthru
          _
        // Predicated region
        $region97: #{tpu_custom_call.1} parent=71 // pred_check
          %p563 = pneg %p235
        $region98: #{tpu_custom_call.1} parent=71 // pred_check_branch
          %565 = sbr.rel (%p563) target = $region100
        $region99: #{tpu_custom_call.1} parent=71 // pred_region
          %566 = dma.done [#allocation12], 1024
        $region100: #{tpu_custom_call.1} parent=71 // pred_fallthru
          _
        // Predicated region
        $region101: #{tpu_custom_call.1} parent=71 // pred_check
          %p567 = pneg %p256
        $region102: #{tpu_custom_call.1} parent=71 // pred_check_branch
          %569 = sbr.rel (%p567) target = $region104
        $region103: #{tpu_custom_call.1} parent=71 // pred_region
          %570 = dma.done [#allocation15], 1024
        $region104: #{tpu_custom_call.1} parent=71 // pred_fallthru
          _
        // Predicated region
        $region105: #{tpu_custom_call.1} parent=71 // pred_check
          %p571 = pneg %p298
        $region106: #{tpu_custom_call.1} parent=71 // pred_check_branch
          %573 = sbr.rel (%p571) target = $region108
        $region107: #{tpu_custom_call.1} parent=71 // pred_region
          %574 = dma.done [#allocation15], 1024
        $region108: #{tpu_custom_call.1} parent=71 // pred_fallthru
          _
        %s575 = sand.u32 %s44, 1
        %s576 = scalar_lea.sflag [#allocation3], %s575
        %s577 = sand.u32 %s44, 1
        %s578 = smul.addr %s577, 16
        %s579 = scalar_lea.vmem [#allocation2], %s578
        %p580 = pneg %p57
        %p581 = pneg %p54
        %s582 = sand.u32 %s36, 1
        %s583 = scalar_lea.sflag [#allocation6], %s582
        %s584 = sand.u32 %s70, 1
        %s585 = smul.addr %s584, 8
        %s586 = scalar_lea.vmem [#allocation5], %s585
        %p587 = pneg %p83
        %p588 = pneg %p80
        %s589 = sand.u32 %s36, 1
        %s590 = scalar_lea.sflag [#allocation6], %s589
        %s591 = sand.u32 %s96, 1
        %s592 = smul.addr %s591, 8
        %s593 = scalar_lea.vmem [#allocation7], %s592
        %p594 = pneg %p109
        %p595 = pneg %p106
        %p596 = pneg %p130
        %p597 = pneg %p127
        %p598 = pneg %p151
        %p599 = pneg %p148
        %p600 = pneg %p172
        %p601 = pneg %p169
        %p602 = pneg %p193
        %p603 = pneg %p190
        %p604 = pneg %p214
        %p605 = pneg %p211
        %p606 = pneg %p235
        %p607 = pneg %p232
        %p608 = pneg %p256
        %p609 = pneg %p253
        %p610 = pneg %p277
        %p611 = pneg %p274
        %p612 = pneg %p298
        %p613 = pneg %p295
        %p614 = pneg %p319
        %p615 = pneg %p316
        %p616 = pneg %p345
        %p617 = pneg %p342
        %s618 = sand.u32 %s332, 1
        %s619 = scalar_lea.sflag [#allocation4], %s618
        %s620 = sand.u32 %s332, 1
        %s621 = smul.addr %s620, 16
        %s622 = scalar_lea.vmem [#allocation17], %s621
        %v624 = vld [vmem:[%s5] sm:$0xff]
        %v625 = vld [vmem:[%s528] sm:$0xf]
        %v626 = vld [vmem:[%s528 + $0x4] sm:$0xf]
        %v627 = vld [vmem:[%s528 + $0x8] sm:$0xf]
        %v628 = vld [vmem:[%s528 + $0xc] sm:$0xf]
        %v629 = vld [vmem:[#allocation8] sm:$0xff]
        %v630 = vld [vmem:[#allocation8 + $0x8] sm:$0xff]
        %v631 = vld [vmem:[#allocation8 + $0x10] sm:$0xff]
        %v632 = vld [vmem:[#allocation8 + $0x18] sm:$0xff]
        %v633 = vld [vmem:[#allocation8 + $0x20] sm:$0xff]
        %v634 = vld [vmem:[#allocation8 + $0x28] sm:$0xff]
        %v635 = vld [vmem:[#allocation8 + $0x30] sm:$0xff]
        %v636 = vld [vmem:[#allocation8 + $0x38] sm:$0xff]
        %v637 = vld [vmem:[#allocation8 + $0x40] sm:$0xff]
        %v638 = vld [vmem:[#allocation8 + $0x48] sm:$0xff]
        %v639 = vld [vmem:[#allocation8 + $0x50] sm:$0xff]
        %v640 = vld [vmem:[#allocation8 + $0x58] sm:$0xff]
        %v641 = vld [vmem:[#allocation8 + $0x60] sm:$0xff]
        %v642 = vld [vmem:[#allocation8 + $0x68] sm:$0xff]
        %v643 = vld [vmem:[#allocation8 + $0x70] sm:$0xff]
        %v644 = vld [vmem:[#allocation8 + $0x78] sm:$0xff]
        %v646 = vlaneseq
        %v647 = vshrl.u32 %v646, 7
        %v648 = vsub.s32 0, %v647
        %v649 = vrot.slane %v624, %v648
        %v650 = vlaneseq
        %v651 = vshrl.u32 %v650, 7
        %v652 = vsub.s32 4, %v651
        %v653 = vrot.slane %v624, %v652
        %v656 = vlaneseq
        %v657 = vshrl.u32 %v656, 7
        %v658 = vsub.s32 0, %v657
        %v659 = vrot.slane %v649, %v658
        %v660 = vlaneseq
        %v661 = vshrl.u32 %v660, 7
        %v662 = vsub.s32 0, %v661
        %v663 = vrot.slane %v653, %v662
        %v668 = vunpack.c.l.b16 %v625
        %v669 = vunpack.c.l.b16 %v626
        %v670 = vunpack.c.l.b16 %v627
        %v671 = vunpack.c.l.b16 %v628
        %v672 = vpack.c.b16 %v669, %v668
        %v673 = vpack.c.b16 %v671, %v670
        %v692 = vunpack.c.l.b16 %v629
        %v693 = vunpack.c.h.b16 %v629
        %v694 = vunpack.c.l.b16 %v630
        %v695 = vunpack.c.h.b16 %v630
        %v696 = vunpack.c.l.b16 %v631
        %v697 = vunpack.c.h.b16 %v631
        %v698 = vunpack.c.l.b16 %v632
        %v699 = vunpack.c.h.b16 %v632
        %v700 = vunpack.c.l.b16 %v633
        %v701 = vunpack.c.h.b16 %v633
        %v702 = vunpack.c.l.b16 %v634
        %v703 = vunpack.c.h.b16 %v634
        %v704 = vunpack.c.l.b16 %v635
        %v705 = vunpack.c.h.b16 %v635
        %v706 = vunpack.c.l.b16 %v636
        %v707 = vunpack.c.h.b16 %v636
        %v708 = vunpack.c.l.b16 %v637
        %v709 = vunpack.c.h.b16 %v637
        %v710 = vunpack.c.l.b16 %v638
        %v711 = vunpack.c.h.b16 %v638
        %v712 = vunpack.c.l.b16 %v639
        %v713 = vunpack.c.h.b16 %v639
        %v714 = vunpack.c.l.b16 %v640
        %v715 = vunpack.c.h.b16 %v640
        %v716 = vunpack.c.l.b16 %v641
        %v717 = vunpack.c.h.b16 %v641
        %v718 = vunpack.c.l.b16 %v642
        %v719 = vunpack.c.h.b16 %v642
        %v720 = vunpack.c.l.b16 %v643
        %v721 = vunpack.c.h.b16 %v643
        %v722 = vunpack.c.l.b16 %v644
        %v723 = vunpack.c.h.b16 %v644
        %v724 = vpack.c.b16 %v694, %v692
        %v725 = vpack.c.b16 %v695, %v693
        %v726 = vpack.c.b16 %v698, %v696
        %v727 = vpack.c.b16 %v699, %v697
        %v728 = vpack.c.b16 %v702, %v700
        %v729 = vpack.c.b16 %v703, %v701
        %v730 = vpack.c.b16 %v706, %v704
        %v731 = vpack.c.b16 %v707, %v705
        %v732 = vpack.c.b16 %v710, %v708
        %v733 = vpack.c.b16 %v711, %v709
        %v734 = vpack.c.b16 %v714, %v712
        %v735 = vpack.c.b16 %v715, %v713
        %v736 = vpack.c.b16 %v718, %v716
        %v737 = vpack.c.b16 %v719, %v717
        %v738 = vpack.c.b16 %v722, %v720
        %v739 = vpack.c.b16 %v723, %v721
        %756 = vmatprep.subr.bf16.mxu0 %v739
        %757 = vmatpush1.bf16.msra.mxu0 %v738
        %758 = vmatprep.subr.bf16.mxu0 %v737
        %759 = vmatpush1.bf16.msra.mxu0 %v736
        %760 = vmatprep.subr.bf16.mxu0 %v735
        %761 = vmatpush1.bf16.msra.mxu0 %v734
        %762 = vmatprep.subr.bf16.mxu0 %v733
        %763 = vmatpush1.bf16.msra.mxu0 %v732
        %764 = vmatprep.subr.bf16.mxu0 %v731
        %765 = vmatpush1.bf16.msra.mxu0 %v730
        %766 = vmatprep.subr.bf16.mxu0 %v729
        %767 = vmatpush1.bf16.msra.mxu0 %v728
        %768 = vmatprep.subr.bf16.mxu0 %v727
        %769 = vmatpush1.bf16.msra.mxu0 %v726
        %770 = vmatprep.subr.bf16.mxu0 %v725
        %771 = vmatpush1.bf16.msra.mxu0 %v724
        %772 = vmatprep.subr.bf16.mxu0 0
        %773 = vmatpush2.bf16.msra.mxu0 0
        %774 = vmatprep.subr.bf16.mxu0 0
        %775 = vmatpush2.bf16.msra.mxu0 0
        %776 = vmatprep.subr.bf16.mxu0 0
        %777 = vmatpush2.bf16.msra.mxu0 0
        %778 = vmatprep.subr.bf16.mxu0 0
        %779 = vmatpush2.bf16.msra.mxu0 0
        %780 = vmatprep.subr.bf16.mxu0 0
        %781 = vmatpush2.bf16.msra.mxu0 0
        %782 = vmatprep.subr.bf16.mxu0 0
        %783 = vmatpush2.bf16.msra.mxu0 0
        %784 = vmatprep.subr.bf16.mxu0 0
        %785 = vmatpush2.bf16.msra.mxu0 0
        %786 = vmatprep.subr.bf16.mxu0 0
        %787 = vmatpush2.bf16.msra.mxu0 0
        %788 = vmatprep.mubr.bf16.mxu0 0
        %789 = vmatmul.mubr.bf16.gmra.mxu0 %v672
        %v790 = vpop.f32.mrf.mxu0
        %v791 = vadd.f32 %v659, %v790
        %v792 = vpop.f32.mrf.mxu0
        %v793 = vadd.f32 %v663, %v792
        %v794 = vpop.f32.mrf.mxu0
        %v795 = vadd.f32 %v659, %v794
        %v796 = vpop.f32.mrf.mxu0
        %v797 = vadd.f32 %v663, %v796
        %798 = vmatprep.mubr.bf16.mxu0 0
        %799 = vmatmul.mubr.bf16.gmra.mxu0 %v673
        %v800 = vpop.f32.mrf.mxu0
        %v801 = vadd.f32 %v659, %v800
        %v802 = vpop.f32.mrf.mxu0
        %v803 = vadd.f32 %v663, %v802
        %v804 = vpop.f32.mrf.mxu0
        %v805 = vadd.f32 %v659, %v804
        %v806 = vpop.f32.mrf.mxu0
        %v807 = vadd.f32 %v663, %v806
        %808 = vdwg.mxu0
        %v809 = vmax.f32 %v791, 0.0
        %v810 = vmax.f32 %v793, 0.0
        %v811 = vmax.f32 %v795, 0.0
        %v812 = vmax.f32 %v797, 0.0
        %v813 = vmax.f32 %v801, 0.0
        %v814 = vmax.f32 %v803, 0.0
        %v815 = vmax.f32 %v805, 0.0
        %v816 = vmax.f32 %v807, 0.0
        %v817 = vpack.c.bf16 %v811, %v809
        %v818 = vpack.c.bf16 %v812, %v810
        %v819 = vpack.c.bf16 %v815, %v813
        %v820 = vpack.c.bf16 %v816, %v814
        %v821 = vld [vmem:[#allocation10] sm:$0xff]
        %v822 = vld [vmem:[#allocation10 + $0x8] sm:$0xff]
        %v823 = vld [vmem:[#allocation10 + $0x10] sm:$0xff]
        %v824 = vld [vmem:[#allocation10 + $0x18] sm:$0xff]
        %v825 = vld [vmem:[#allocation10 + $0x20] sm:$0xff]
        %v826 = vld [vmem:[#allocation10 + $0x28] sm:$0xff]
        %v827 = vld [vmem:[#allocation10 + $0x30] sm:$0xff]
        %v828 = vld [vmem:[#allocation10 + $0x38] sm:$0xff]
        %v829 = vld [vmem:[#allocation10 + $0x40] sm:$0xff]
        %v830 = vld [vmem:[#allocation10 + $0x48] sm:$0xff]
        %v831 = vld [vmem:[#allocation10 + $0x50] sm:$0xff]
        %v832 = vld [vmem:[#allocation10 + $0x58] sm:$0xff]
        %v833 = vld [vmem:[#allocation10 + $0x60] sm:$0xff]
        %v834 = vld [vmem:[#allocation10 + $0x68] sm:$0xff]
        %v835 = vld [vmem:[#allocation10 + $0x70] sm:$0xff]
        %v836 = vld [vmem:[#allocation10 + $0x78] sm:$0xff]
        %v837 = vld [vmem:[#allocation10 + $0x80] sm:$0xff]
        %v838 = vld [vmem:[#allocation10 + $0x88] sm:$0xff]
        %v839 = vld [vmem:[#allocation10 + $0x90] sm:$0xff]
        %v840 = vld [vmem:[#allocation10 + $0x98] sm:$0xff]
        %v841 = vld [vmem:[#allocation10 + $0xa0] sm:$0xff]
        %v842 = vld [vmem:[#allocation10 + $0xa8] sm:$0xff]
        %v843 = vld [vmem:[#allocation10 + $0xb0] sm:$0xff]
        %v844 = vld [vmem:[#allocation10 + $0xb8] sm:$0xff]
        %v845 = vld [vmem:[#allocation10 + $0xc0] sm:$0xff]
        %v846 = vld [vmem:[#allocation10 + $0xc8] sm:$0xff]
        %v847 = vld [vmem:[#allocation10 + $0xd0] sm:$0xff]
        %v848 = vld [vmem:[#allocation10 + $0xd8] sm:$0xff]
        %v849 = vld [vmem:[#allocation10 + $0xe0] sm:$0xff]
        %v850 = vld [vmem:[#allocation10 + $0xe8] sm:$0xff]
        %v851 = vld [vmem:[#allocation10 + $0xf0] sm:$0xff]
        %v852 = vld [vmem:[#allocation10 + $0xf8] sm:$0xff]
        %v853 = vlaneseq
        %v854 = vshrl.u32 %v853, 7
        %v855 = vsub.s32 1, %v854
        %v856 = vrot.slane %v624, %v855
        %v857 = vlaneseq
        %v858 = vshrl.u32 %v857, 7
        %v859 = vsub.s32 5, %v858
        %v860 = vrot.slane %v624, %v859
        %v863 = vlaneseq
        %v864 = vshrl.u32 %v863, 7
        %v865 = vsub.s32 1, %v864
        %v866 = vrot.slane %v856, %v865
        %v867 = vlaneseq
        %v868 = vshrl.u32 %v867, 7
        %v869 = vsub.s32 1, %v868
        %v870 = vrot.slane %v860, %v869
        %v903 = vunpack.c.l.b16 %v821
        %v904 = vunpack.c.h.b16 %v821
        %v905 = vunpack.c.l.b16 %v822
        %v906 = vunpack.c.h.b16 %v822
        %v907 = vunpack.c.l.b16 %v823
        %v908 = vunpack.c.h.b16 %v823
        %v909 = vunpack.c.l.b16 %v824
        %v910 = vunpack.c.h.b16 %v824
        %v911 = vunpack.c.l.b16 %v825
        %v912 = vunpack.c.h.b16 %v825
        %v913 = vunpack.c.l.b16 %v826
        %v914 = vunpack.c.h.b16 %v826
        %v915 = vunpack.c.l.b16 %v827
        %v916 = vunpack.c.h.b16 %v827
        %v917 = vunpack.c.l.b16 %v828
        %v918 = vunpack.c.h.b16 %v828
        %v919 = vunpack.c.l.b16 %v829
        %v920 = vunpack.c.h.b16 %v829
        %v921 = vunpack.c.l.b16 %v830
        %v922 = vunpack.c.h.b16 %v830
        %v923 = vunpack.c.l.b16 %v831
        %v924 = vunpack.c.h.b16 %v831
        %v925 = vunpack.c.l.b16 %v832
        %v926 = vunpack.c.h.b16 %v832
        %v927 = vunpack.c.l.b16 %v833
        %v928 = vunpack.c.h.b16 %v833
        %v929 = vunpack.c.l.b16 %v834
        %v930 = vunpack.c.h.b16 %v834
        %v931 = vunpack.c.l.b16 %v835
        %v932 = vunpack.c.h.b16 %v835
        %v933 = vunpack.c.l.b16 %v836
        %v934 = vunpack.c.h.b16 %v836
        %v935 = vunpack.c.l.b16 %v837
        %v936 = vunpack.c.h.b16 %v837
        %v937 = vunpack.c.l.b16 %v838
        %v938 = vunpack.c.h.b16 %v838
        %v939 = vunpack.c.l.b16 %v839
        %v940 = vunpack.c.h.b16 %v839
        %v941 = vunpack.c.l.b16 %v840
        %v942 = vunpack.c.h.b16 %v840
        %v943 = vunpack.c.l.b16 %v841
        %v944 = vunpack.c.h.b16 %v841
        %v945 = vunpack.c.l.b16 %v842
        %v946 = vunpack.c.h.b16 %v842
        %v947 = vunpack.c.l.b16 %v843
        %v948 = vunpack.c.h.b16 %v843
        %v949 = vunpack.c.l.b16 %v844
        %v950 = vunpack.c.h.b16 %v844
        %v951 = vunpack.c.l.b16 %v845
        %v952 = vunpack.c.h.b16 %v845
        %v953 = vunpack.c.l.b16 %v846
        %v954 = vunpack.c.h.b16 %v846
        %v955 = vunpack.c.l.b16 %v847
        %v956 = vunpack.c.h.b16 %v847
        %v957 = vunpack.c.l.b16 %v848
        %v958 = vunpack.c.h.b16 %v848
        %v959 = vunpack.c.l.b16 %v849
        %v960 = vunpack.c.h.b16 %v849
        %v961 = vunpack.c.l.b16 %v850
        %v962 = vunpack.c.h.b16 %v850
        %v963 = vunpack.c.l.b16 %v851
        %v964 = vunpack.c.h.b16 %v851
        %v965 = vunpack.c.l.b16 %v852
        %v966 = vunpack.c.h.b16 %v852
        %v967 = vpack.c.b16 %v905, %v903
        %v968 = vpack.c.b16 %v906, %v904
        %v969 = vpack.c.b16 %v909, %v907
        %v970 = vpack.c.b16 %v910, %v908
        %v971 = vpack.c.b16 %v913, %v911
        %v972 = vpack.c.b16 %v914, %v912
        %v973 = vpack.c.b16 %v917, %v915
        %v974 = vpack.c.b16 %v918, %v916
        %v975 = vpack.c.b16 %v921, %v919
        %v976 = vpack.c.b16 %v922, %v920
        %v977 = vpack.c.b16 %v925, %v923
        %v978 = vpack.c.b16 %v926, %v924
        %v979 = vpack.c.b16 %v929, %v927
        %v980 = vpack.c.b16 %v930, %v928
        %v981 = vpack.c.b16 %v933, %v931
        %v982 = vpack.c.b16 %v934, %v932
        %v983 = vpack.c.b16 %v937, %v935
        %v984 = vpack.c.b16 %v938, %v936
        %v985 = vpack.c.b16 %v941, %v939
        %v986 = vpack.c.b16 %v942, %v940
        %v987 = vpack.c.b16 %v945, %v943
        %v988 = vpack.c.b16 %v946, %v944
        %v989 = vpack.c.b16 %v949, %v947
        %v990 = vpack.c.b16 %v950, %v948
        %v991 = vpack.c.b16 %v953, %v951
        %v992 = vpack.c.b16 %v954, %v952
        %v993 = vpack.c.b16 %v957, %v955
        %v994 = vpack.c.b16 %v958, %v956
        %v995 = vpack.c.b16 %v961, %v959
        %v996 = vpack.c.b16 %v962, %v960
        %v997 = vpack.c.b16 %v965, %v963
        %v998 = vpack.c.b16 %v966, %v964
        %1031 = vmatprep.subr.bf16.mxu0 %v982
        %1032 = vmatpush1.bf16.msra.mxu0 %v981
        %1033 = vmatprep.subr.bf16.mxu0 %v980
        %1034 = vmatpush1.bf16.msra.mxu0 %v979
        %1035 = vmatprep.subr.bf16.mxu0 %v978
        %1036 = vmatpush1.bf16.msra.mxu0 %v977
        %1037 = vmatprep.subr.bf16.mxu0 %v976
        %1038 = vmatpush1.bf16.msra.mxu0 %v975
        %1039 = vmatprep.subr.bf16.mxu0 %v974
        %1040 = vmatpush1.bf16.msra.mxu0 %v973
        %1041 = vmatprep.subr.bf16.mxu0 %v972
        %1042 = vmatpush1.bf16.msra.mxu0 %v971
        %1043 = vmatprep.subr.bf16.mxu0 %v970
        %1044 = vmatpush1.bf16.msra.mxu0 %v969
        %1045 = vmatprep.subr.bf16.mxu0 %v968
        %1046 = vmatpush1.bf16.msra.mxu0 %v967
        %1047 = vmatprep.subr.bf16.mxu0 %v998
        %1048 = vmatpush2.bf16.msra.mxu0 %v997
        %1049 = vmatprep.subr.bf16.mxu0 %v996
        %1050 = vmatpush2.bf16.msra.mxu0 %v995
        %1051 = vmatprep.subr.bf16.mxu0 %v994
        %1052 = vmatpush2.bf16.msra.mxu0 %v993
        %1053 = vmatprep.subr.bf16.mxu0 %v992
        %1054 = vmatpush2.bf16.msra.mxu0 %v991
        %1055 = vmatprep.subr.bf16.mxu0 %v990
        %1056 = vmatpush2.bf16.msra.mxu0 %v989
        %1057 = vmatprep.subr.bf16.mxu0 %v988
        %1058 = vmatpush2.bf16.msra.mxu0 %v987
        %1059 = vmatprep.subr.bf16.mxu0 %v986
        %1060 = vmatpush2.bf16.msra.mxu0 %v985
        %1061 = vmatprep.subr.bf16.mxu0 %v984
        %1062 = vmatpush2.bf16.msra.mxu0 %v983
        %1063 = vmatprep.mubr.bf16.mxu0 %v818
        %1064 = vmatmul.mubr.bf16.gmra.mxu0 %v817
        %v1065 = vpop.f32.mrf.mxu0
        %v1066 = vadd.f32 %v866, %v1065
        %v1067 = vpop.f32.mrf.mxu0
        %v1068 = vadd.f32 %v870, %v1067
        %v1069 = vpop.f32.mrf.mxu0
        %v1070 = vadd.f32 %v866, %v1069
        %v1071 = vpop.f32.mrf.mxu0
        %v1072 = vadd.f32 %v870, %v1071
        %1073 = vmatprep.mubr.bf16.mxu0 %v820
        %1074 = vmatmul.mubr.bf16.gmra.mxu0 %v819
        %v1075 = vpop.f32.mrf.mxu0
        %v1076 = vadd.f32 %v866, %v1075
        %v1077 = vpop.f32.mrf.mxu0
        %v1078 = vadd.f32 %v870, %v1077
        %v1079 = vpop.f32.mrf.mxu0
        %v1080 = vadd.f32 %v866, %v1079
        %v1081 = vpop.f32.mrf.mxu0
        %v1082 = vadd.f32 %v870, %v1081
        %1083 = vdwg.mxu0
        %v1084 = vmax.f32 %v1066, 0.0
        %v1085 = vmax.f32 %v1068, 0.0
        %v1086 = vmax.f32 %v1070, 0.0
        %v1087 = vmax.f32 %v1072, 0.0
        %v1088 = vmax.f32 %v1076, 0.0
        %v1089 = vmax.f32 %v1078, 0.0
        %v1090 = vmax.f32 %v1080, 0.0
        %v1091 = vmax.f32 %v1082, 0.0
        %v1092 = vpack.c.bf16 %v1086, %v1084
        %v1093 = vpack.c.bf16 %v1087, %v1085
        %v1094 = vpack.c.bf16 %v1090, %v1088
        %v1095 = vpack.c.bf16 %v1091, %v1089
        %s1096 = scalar_lea.vmem [#allocation10], 256
        %v1097 = vld [vmem:[%s1096] sm:$0xff]
        %v1098 = vld [vmem:[%s1096 + $0x8] sm:$0xff]
        %v1099 = vld [vmem:[%s1096 + $0x10] sm:$0xff]
        %v1100 = vld [vmem:[%s1096 + $0x18] sm:$0xff]
        %v1101 = vld [vmem:[%s1096 + $0x20] sm:$0xff]
        %v1102 = vld [vmem:[%s1096 + $0x28] sm:$0xff]
        %v1103 = vld [vmem:[%s1096 + $0x30] sm:$0xff]
        %v1104 = vld [vmem:[%s1096 + $0x38] sm:$0xff]
        %v1105 = vld [vmem:[%s1096 + $0x40] sm:$0xff]
        %v1106 = vld [vmem:[%s1096 + $0x48] sm:$0xff]
        %v1107 = vld [vmem:[%s1096 + $0x50] sm:$0xff]
        %v1108 = vld [vmem:[%s1096 + $0x58] sm:$0xff]
        %v1109 = vld [vmem:[%s1096 + $0x60] sm:$0xff]
        %v1110 = vld [vmem:[%s1096 + $0x68] sm:$0xff]
        %v1111 = vld [vmem:[%s1096 + $0x70] sm:$0xff]
        %v1112 = vld [vmem:[%s1096 + $0x78] sm:$0xff]
        %v1113 = vld [vmem:[%s1096 + $0x80] sm:$0xff]
        %v1114 = vld [vmem:[%s1096 + $0x88] sm:$0xff]
        %v1115 = vld [vmem:[%s1096 + $0x90] sm:$0xff]
        %v1116 = vld [vmem:[%s1096 + $0x98] sm:$0xff]
        %v1117 = vld [vmem:[%s1096 + $0xa0] sm:$0xff]
        %v1118 = vld [vmem:[%s1096 + $0xa8] sm:$0xff]
        %v1119 = vld [vmem:[%s1096 + $0xb0] sm:$0xff]
        %v1120 = vld [vmem:[%s1096 + $0xb8] sm:$0xff]
        %v1121 = vld [vmem:[%s1096 + $0xc0] sm:$0xff]
        %v1122 = vld [vmem:[%s1096 + $0xc8] sm:$0xff]
        %v1123 = vld [vmem:[%s1096 + $0xd0] sm:$0xff]
        %v1124 = vld [vmem:[%s1096 + $0xd8] sm:$0xff]
        %v1125 = vld [vmem:[%s1096 + $0xe0] sm:$0xff]
        %v1126 = vld [vmem:[%s1096 + $0xe8] sm:$0xff]
        %v1127 = vld [vmem:[%s1096 + $0xf0] sm:$0xff]
        %v1128 = vld [vmem:[%s1096 + $0xf8] sm:$0xff]
        %v1129 = vlaneseq
        %v1130 = vshrl.u32 %v1129, 7
        %v1131 = vsub.s32 2, %v1130
        %v1132 = vrot.slane %v624, %v1131
        %v1133 = vlaneseq
        %v1134 = vshrl.u32 %v1133, 7
        %v1135 = vsub.s32 6, %v1134
        %v1136 = vrot.slane %v624, %v1135
        %v1139 = vlaneseq
        %v1140 = vshrl.u32 %v1139, 7
        %v1141 = vsub.s32 2, %v1140
        %v1142 = vrot.slane %v1132, %v1141
        %v1143 = vlaneseq
        %v1144 = vshrl.u32 %v1143, 7
        %v1145 = vsub.s32 2, %v1144
        %v1146 = vrot.slane %v1136, %v1145
        %v1179 = vunpack.c.l.b16 %v1097
        %v1180 = vunpack.c.h.b16 %v1097
        %v1181 = vunpack.c.l.b16 %v1098
        %v1182 = vunpack.c.h.b16 %v1098
        %v1183 = vunpack.c.l.b16 %v1099
        %v1184 = vunpack.c.h.b16 %v1099
        %v1185 = vunpack.c.l.b16 %v1100
        %v1186 = vunpack.c.h.b16 %v1100
        %v1187 = vunpack.c.l.b16 %v1101
        %v1188 = vunpack.c.h.b16 %v1101
        %v1189 = vunpack.c.l.b16 %v1102
        %v1190 = vunpack.c.h.b16 %v1102
        %v1191 = vunpack.c.l.b16 %v1103
        %v1192 = vunpack.c.h.b16 %v1103
        %v1193 = vunpack.c.l.b16 %v1104
        %v1194 = vunpack.c.h.b16 %v1104
        %v1195 = vunpack.c.l.b16 %v1105
        %v1196 = vunpack.c.h.b16 %v1105
        %v1197 = vunpack.c.l.b16 %v1106
        %v1198 = vunpack.c.h.b16 %v1106
        %v1199 = vunpack.c.l.b16 %v1107
        %v1200 = vunpack.c.h.b16 %v1107
        %v1201 = vunpack.c.l.b16 %v1108
        %v1202 = vunpack.c.h.b16 %v1108
        %v1203 = vunpack.c.l.b16 %v1109
        %v1204 = vunpack.c.h.b16 %v1109
        %v1205 = vunpack.c.l.b16 %v1110
        %v1206 = vunpack.c.h.b16 %v1110
        %v1207 = vunpack.c.l.b16 %v1111
        %v1208 = vunpack.c.h.b16 %v1111
        %v1209 = vunpack.c.l.b16 %v1112
        %v1210 = vunpack.c.h.b16 %v1112
        %v1211 = vunpack.c.l.b16 %v1113
        %v1212 = vunpack.c.h.b16 %v1113
        %v1213 = vunpack.c.l.b16 %v1114
        %v1214 = vunpack.c.h.b16 %v1114
        %v1215 = vunpack.c.l.b16 %v1115
        %v1216 = vunpack.c.h.b16 %v1115
        %v1217 = vunpack.c.l.b16 %v1116
        %v1218 = vunpack.c.h.b16 %v1116
        %v1219 = vunpack.c.l.b16 %v1117
        %v1220 = vunpack.c.h.b16 %v1117
        %v1221 = vunpack.c.l.b16 %v1118
        %v1222 = vunpack.c.h.b16 %v1118
        %v1223 = vunpack.c.l.b16 %v1119
        %v1224 = vunpack.c.h.b16 %v1119
        %v1225 = vunpack.c.l.b16 %v1120
        %v1226 = vunpack.c.h.b16 %v1120
        %v1227 = vunpack.c.l.b16 %v1121
        %v1228 = vunpack.c.h.b16 %v1121
        %v1229 = vunpack.c.l.b16 %v1122
        %v1230 = vunpack.c.h.b16 %v1122
        %v1231 = vunpack.c.l.b16 %v1123
        %v1232 = vunpack.c.h.b16 %v1123
        %v1233 = vunpack.c.l.b16 %v1124
        %v1234 = vunpack.c.h.b16 %v1124
        %v1235 = vunpack.c.l.b16 %v1125
        %v1236 = vunpack.c.h.b16 %v1125
        %v1237 = vunpack.c.l.b16 %v1126
        %v1238 = vunpack.c.h.b16 %v1126
        %v1239 = vunpack.c.l.b16 %v1127
        %v1240 = vunpack.c.h.b16 %v1127
        %v1241 = vunpack.c.l.b16 %v1128
        %v1242 = vunpack.c.h.b16 %v1128
        %v1243 = vpack.c.b16 %v1181, %v1179
        %v1244 = vpack.c.b16 %v1182, %v1180
        %v1245 = vpack.c.b16 %v1185, %v1183
        %v1246 = vpack.c.b16 %v1186, %v1184
        %v1247 = vpack.c.b16 %v1189, %v1187
        %v1248 = vpack.c.b16 %v1190, %v1188
        %v1249 = vpack.c.b16 %v1193, %v1191
        %v1250 = vpack.c.b16 %v1194, %v1192
        %v1251 = vpack.c.b16 %v1197, %v1195
        %v1252 = vpack.c.b16 %v1198, %v1196
        %v1253 = vpack.c.b16 %v1201, %v1199
        %v1254 = vpack.c.b16 %v1202, %v1200
        %v1255 = vpack.c.b16 %v1205, %v1203
        %v1256 = vpack.c.b16 %v1206, %v1204
        %v1257 = vpack.c.b16 %v1209, %v1207
        %v1258 = vpack.c.b16 %v1210, %v1208
        %v1259 = vpack.c.b16 %v1213, %v1211
        %v1260 = vpack.c.b16 %v1214, %v1212
        %v1261 = vpack.c.b16 %v1217, %v1215
        %v1262 = vpack.c.b16 %v1218, %v1216
        %v1263 = vpack.c.b16 %v1221, %v1219
        %v1264 = vpack.c.b16 %v1222, %v1220
        %v1265 = vpack.c.b16 %v1225, %v1223
        %v1266 = vpack.c.b16 %v1226, %v1224
        %v1267 = vpack.c.b16 %v1229, %v1227
        %v1268 = vpack.c.b16 %v1230, %v1228
        %v1269 = vpack.c.b16 %v1233, %v1231
        %v1270 = vpack.c.b16 %v1234, %v1232
        %v1271 = vpack.c.b16 %v1237, %v1235
        %v1272 = vpack.c.b16 %v1238, %v1236
        %v1273 = vpack.c.b16 %v1241, %v1239
        %v1274 = vpack.c.b16 %v1242, %v1240
        %1307 = vmatprep.subr.bf16.mxu0 %v1258
        %1308 = vmatpush1.bf16.msra.mxu0 %v1257
        %1309 = vmatprep.subr.bf16.mxu0 %v1256
        %1310 = vmatpush1.bf16.msra.mxu0 %v1255
        %1311 = vmatprep.subr.bf16.mxu0 %v1254
        %1312 = vmatpush1.bf16.msra.mxu0 %v1253
        %1313 = vmatprep.subr.bf16.mxu0 %v1252
        %1314 = vmatpush1.bf16.msra.mxu0 %v1251
        %1315 = vmatprep.subr.bf16.mxu0 %v1250
        %1316 = vmatpush1.bf16.msra.mxu0 %v1249
        %1317 = vmatprep.subr.bf16.mxu0 %v1248
        %1318 = vmatpush1.bf16.msra.mxu0 %v1247
        %1319 = vmatprep.subr.bf16.mxu0 %v1246
        %1320 = vmatpush1.bf16.msra.mxu0 %v1245
        %1321 = vmatprep.subr.bf16.mxu0 %v1244
        %1322 = vmatpush1.bf16.msra.mxu0 %v1243
        %1323 = vmatprep.subr.bf16.mxu0 %v1274
        %1324 = vmatpush2.bf16.msra.mxu0 %v1273
        %1325 = vmatprep.subr.bf16.mxu0 %v1272
        %1326 = vmatpush2.bf16.msra.mxu0 %v1271
        %1327 = vmatprep.subr.bf16.mxu0 %v1270
        %1328 = vmatpush2.bf16.msra.mxu0 %v1269
        %1329 = vmatprep.subr.bf16.mxu0 %v1268
        %1330 = vmatpush2.bf16.msra.mxu0 %v1267
        %1331 = vmatprep.subr.bf16.mxu0 %v1266
        %1332 = vmatpush2.bf16.msra.mxu0 %v1265
        %1333 = vmatprep.subr.bf16.mxu0 %v1264
        %1334 = vmatpush2.bf16.msra.mxu0 %v1263
        %1335 = vmatprep.subr.bf16.mxu0 %v1262
        %1336 = vmatpush2.bf16.msra.mxu0 %v1261
        %1337 = vmatprep.subr.bf16.mxu0 %v1260
        %1338 = vmatpush2.bf16.msra.mxu0 %v1259
        %1339 = vmatprep.mubr.bf16.mxu0 %v1093
        %1340 = vmatmul.mubr.bf16.gmra.mxu0 %v1092
        %v1341 = vpop.f32.mrf.mxu0
        %v1342 = vadd.f32 %v1142, %v1341
        %v1343 = vpop.f32.mrf.mxu0
        %v1344 = vadd.f32 %v1146, %v1343
        %v1345 = vpop.f32.mrf.mxu0
        %v1346 = vadd.f32 %v1142, %v1345
        %v1347 = vpop.f32.mrf.mxu0
        %v1348 = vadd.f32 %v1146, %v1347
        %1349 = vmatprep.mubr.bf16.mxu0 %v1095
        %1350 = vmatmul.mubr.bf16.gmra.mxu0 %v1094
        %v1351 = vpop.f32.mrf.mxu0
        %v1352 = vadd.f32 %v1142, %v1351
        %v1353 = vpop.f32.mrf.mxu0
        %v1354 = vadd.f32 %v1146, %v1353
        %v1355 = vpop.f32.mrf.mxu0
        %v1356 = vadd.f32 %v1142, %v1355
        %v1357 = vpop.f32.mrf.mxu0
        %v1358 = vadd.f32 %v1146, %v1357
        %1359 = vdwg.mxu0
        %v1360 = vmax.f32 %v1342, 0.0
        %v1361 = vmax.f32 %v1344, 0.0
        %v1362 = vmax.f32 %v1346, 0.0
        %v1363 = vmax.f32 %v1348, 0.0
        %v1364 = vmax.f32 %v1352, 0.0
        %v1365 = vmax.f32 %v1354, 0.0
        %v1366 = vmax.f32 %v1356, 0.0
        %v1367 = vmax.f32 %v1358, 0.0
        %v1368 = vpack.c.bf16 %v1362, %v1360
        %v1369 = vpack.c.bf16 %v1363, %v1361
        %v1370 = vpack.c.bf16 %v1366, %v1364
        %v1371 = vpack.c.bf16 %v1367, %v1365
        %s1372 = scalar_lea.vmem [#allocation10], 512
        %v1373 = vld [vmem:[%s1372] sm:$0xff]
        %v1374 = vld [vmem:[%s1372 + $0x8] sm:$0xff]
        %v1375 = vld [vmem:[%s1372 + $0x10] sm:$0xff]
        %v1376 = vld [vmem:[%s1372 + $0x18] sm:$0xff]
        %v1377 = vld [vmem:[%s1372 + $0x20] sm:$0xff]
        %v1378 = vld [vmem:[%s1372 + $0x28] sm:$0xff]
        %v1379 = vld [vmem:[%s1372 + $0x30] sm:$0xff]
        %v1380 = vld [vmem:[%s1372 + $0x38] sm:$0xff]
        %v1381 = vld [vmem:[%s1372 + $0x40] sm:$0xff]
        %v1382 = vld [vmem:[%s1372 + $0x48] sm:$0xff]
        %v1383 = vld [vmem:[%s1372 + $0x50] sm:$0xff]
        %v1384 = vld [vmem:[%s1372 + $0x58] sm:$0xff]
        %v1385 = vld [vmem:[%s1372 + $0x60] sm:$0xff]
        %v1386 = vld [vmem:[%s1372 + $0x68] sm:$0xff]
        %v1387 = vld [vmem:[%s1372 + $0x70] sm:$0xff]
        %v1388 = vld [vmem:[%s1372 + $0x78] sm:$0xff]
        %v1389 = vld [vmem:[%s1372 + $0x80] sm:$0xff]
        %v1390 = vld [vmem:[%s1372 + $0x88] sm:$0xff]
        %v1391 = vld [vmem:[%s1372 + $0x90] sm:$0xff]
        %v1392 = vld [vmem:[%s1372 + $0x98] sm:$0xff]
        %v1393 = vld [vmem:[%s1372 + $0xa0] sm:$0xff]
        %v1394 = vld [vmem:[%s1372 + $0xa8] sm:$0xff]
        %v1395 = vld [vmem:[%s1372 + $0xb0] sm:$0xff]
        %v1396 = vld [vmem:[%s1372 + $0xb8] sm:$0xff]
        %v1397 = vld [vmem:[%s1372 + $0xc0] sm:$0xff]
        %v1398 = vld [vmem:[%s1372 + $0xc8] sm:$0xff]
        %v1399 = vld [vmem:[%s1372 + $0xd0] sm:$0xff]
        %v1400 = vld [vmem:[%s1372 + $0xd8] sm:$0xff]
        %v1401 = vld [vmem:[%s1372 + $0xe0] sm:$0xff]
        %v1402 = vld [vmem:[%s1372 + $0xe8] sm:$0xff]
        %v1403 = vld [vmem:[%s1372 + $0xf0] sm:$0xff]
        %v1404 = vld [vmem:[%s1372 + $0xf8] sm:$0xff]
        %v1405 = vlaneseq
        %v1406 = vshrl.u32 %v1405, 7
        %v1407 = vsub.s32 3, %v1406
        %v1408 = vrot.slane %v624, %v1407
        %v1409 = vlaneseq
        %v1410 = vshrl.u32 %v1409, 7
        %v1411 = vsub.s32 7, %v1410
        %v1412 = vrot.slane %v624, %v1411
        %v1415 = vlaneseq
        %v1416 = vshrl.u32 %v1415, 7
        %v1417 = vsub.s32 3, %v1416
        %v1418 = vrot.slane %v1408, %v1417
        %v1419 = vlaneseq
        %v1420 = vshrl.u32 %v1419, 7
        %v1421 = vsub.s32 3, %v1420
        %v1422 = vrot.slane %v1412, %v1421
        %v1455 = vunpack.c.l.b16 %v1373
        %v1456 = vunpack.c.h.b16 %v1373
        %v1457 = vunpack.c.l.b16 %v1374
        %v1458 = vunpack.c.h.b16 %v1374
        %v1459 = vunpack.c.l.b16 %v1375
        %v1460 = vunpack.c.h.b16 %v1375
        %v1461 = vunpack.c.l.b16 %v1376
        %v1462 = vunpack.c.h.b16 %v1376
        %v1463 = vunpack.c.l.b16 %v1377
        %v1464 = vunpack.c.h.b16 %v1377
        %v1465 = vunpack.c.l.b16 %v1378
        %v1466 = vunpack.c.h.b16 %v1378
        %v1467 = vunpack.c.l.b16 %v1379
        %v1468 = vunpack.c.h.b16 %v1379
        %v1469 = vunpack.c.l.b16 %v1380
        %v1470 = vunpack.c.h.b16 %v1380
        %v1471 = vunpack.c.l.b16 %v1381
        %v1472 = vunpack.c.h.b16 %v1381
        %v1473 = vunpack.c.l.b16 %v1382
        %v1474 = vunpack.c.h.b16 %v1382
        %v1475 = vunpack.c.l.b16 %v1383
        %v1476 = vunpack.c.h.b16 %v1383
        %v1477 = vunpack.c.l.b16 %v1384
        %v1478 = vunpack.c.h.b16 %v1384
        %v1479 = vunpack.c.l.b16 %v1385
        %v1480 = vunpack.c.h.b16 %v1385
        %v1481 = vunpack.c.l.b16 %v1386
        %v1482 = vunpack.c.h.b16 %v1386
        %v1483 = vunpack.c.l.b16 %v1387
        %v1484 = vunpack.c.h.b16 %v1387
        %v1485 = vunpack.c.l.b16 %v1388
        %v1486 = vunpack.c.h.b16 %v1388
        %v1487 = vunpack.c.l.b16 %v1389
        %v1488 = vunpack.c.h.b16 %v1389
        %v1489 = vunpack.c.l.b16 %v1390
        %v1490 = vunpack.c.h.b16 %v1390
        %v1491 = vunpack.c.l.b16 %v1391
        %v1492 = vunpack.c.h.b16 %v1391
        %v1493 = vunpack.c.l.b16 %v1392
        %v1494 = vunpack.c.h.b16 %v1392
        %v1495 = vunpack.c.l.b16 %v1393
        %v1496 = vunpack.c.h.b16 %v1393
        %v1497 = vunpack.c.l.b16 %v1394
        %v1498 = vunpack.c.h.b16 %v1394
        %v1499 = vunpack.c.l.b16 %v1395
        %v1500 = vunpack.c.h.b16 %v1395
        %v1501 = vunpack.c.l.b16 %v1396
        %v1502 = vunpack.c.h.b16 %v1396
        %v1503 = vunpack.c.l.b16 %v1397
        %v1504 = vunpack.c.h.b16 %v1397
        %v1505 = vunpack.c.l.b16 %v1398
        %v1506 = vunpack.c.h.b16 %v1398
        %v1507 = vunpack.c.l.b16 %v1399
        %v1508 = vunpack.c.h.b16 %v1399
        %v1509 = vunpack.c.l.b16 %v1400
        %v1510 = vunpack.c.h.b16 %v1400
        %v1511 = vunpack.c.l.b16 %v1401
        %v1512 = vunpack.c.h.b16 %v1401
        %v1513 = vunpack.c.l.b16 %v1402
        %v1514 = vunpack.c.h.b16 %v1402
        %v1515 = vunpack.c.l.b16 %v1403
        %v1516 = vunpack.c.h.b16 %v1403
        %v1517 = vunpack.c.l.b16 %v1404
        %v1518 = vunpack.c.h.b16 %v1404
        %v1519 = vpack.c.b16 %v1457, %v1455
        %v1520 = vpack.c.b16 %v1458, %v1456
        %v1521 = vpack.c.b16 %v1461, %v1459
        %v1522 = vpack.c.b16 %v1462, %v1460
        %v1523 = vpack.c.b16 %v1465, %v1463
        %v1524 = vpack.c.b16 %v1466, %v1464
        %v1525 = vpack.c.b16 %v1469, %v1467
        %v1526 = vpack.c.b16 %v1470, %v1468
        %v1527 = vpack.c.b16 %v1473, %v1471
        %v1528 = vpack.c.b16 %v1474, %v1472
        %v1529 = vpack.c.b16 %v1477, %v1475
        %v1530 = vpack.c.b16 %v1478, %v1476
        %v1531 = vpack.c.b16 %v1481, %v1479
        %v1532 = vpack.c.b16 %v1482, %v1480
        %v1533 = vpack.c.b16 %v1485, %v1483
        %v1534 = vpack.c.b16 %v1486, %v1484
        %v1535 = vpack.c.b16 %v1489, %v1487
        %v1536 = vpack.c.b16 %v1490, %v1488
        %v1537 = vpack.c.b16 %v1493, %v1491
        %v1538 = vpack.c.b16 %v1494, %v1492
        %v1539 = vpack.c.b16 %v1497, %v1495
        %v1540 = vpack.c.b16 %v1498, %v1496
        %v1541 = vpack.c.b16 %v1501, %v1499
        %v1542 = vpack.c.b16 %v1502, %v1500
        %v1543 = vpack.c.b16 %v1505, %v1503
        %v1544 = vpack.c.b16 %v1506, %v1504
        %v1545 = vpack.c.b16 %v1509, %v1507
        %v1546 = vpack.c.b16 %v1510, %v1508
        %v1547 = vpack.c.b16 %v1513, %v1511
        %v1548 = vpack.c.b16 %v1514, %v1512
        %v1549 = vpack.c.b16 %v1517, %v1515
        %v1550 = vpack.c.b16 %v1518, %v1516
        %1583 = vmatprep.subr.bf16.mxu0 %v1534
        %1584 = vmatpush1.bf16.msra.mxu0 %v1533
        %1585 = vmatprep.subr.bf16.mxu0 %v1532
        %1586 = vmatpush1.bf16.msra.mxu0 %v1531
        %1587 = vmatprep.subr.bf16.mxu0 %v1530
        %1588 = vmatpush1.bf16.msra.mxu0 %v1529
        %1589 = vmatprep.subr.bf16.mxu0 %v1528
        %1590 = vmatpush1.bf16.msra.mxu0 %v1527
        %1591 = vmatprep.subr.bf16.mxu0 %v1526
        %1592 = vmatpush1.bf16.msra.mxu0 %v1525
        %1593 = vmatprep.subr.bf16.mxu0 %v1524
        %1594 = vmatpush1.bf16.msra.mxu0 %v1523
        %1595 = vmatprep.subr.bf16.mxu0 %v1522
        %1596 = vmatpush1.bf16.msra.mxu0 %v1521
        %1597 = vmatprep.subr.bf16.mxu0 %v1520
        %1598 = vmatpush1.bf16.msra.mxu0 %v1519
        %1599 = vmatprep.subr.bf16.mxu0 %v1550
        %1600 = vmatpush2.bf16.msra.mxu0 %v1549
        %1601 = vmatprep.subr.bf16.mxu0 %v1548
        %1602 = vmatpush2.bf16.msra.mxu0 %v1547
        %1603 = vmatprep.subr.bf16.mxu0 %v1546
        %1604 = vmatpush2.bf16.msra.mxu0 %v1545
        %1605 = vmatprep.subr.bf16.mxu0 %v1544
        %1606 = vmatpush2.bf16.msra.mxu0 %v1543
        %1607 = vmatprep.subr.bf16.mxu0 %v1542
        %1608 = vmatpush2.bf16.msra.mxu0 %v1541
        %1609 = vmatprep.subr.bf16.mxu0 %v1540
        %1610 = vmatpush2.bf16.msra.mxu0 %v1539
        %1611 = vmatprep.subr.bf16.mxu0 %v1538
        %1612 = vmatpush2.bf16.msra.mxu0 %v1537
        %1613 = vmatprep.subr.bf16.mxu0 %v1536
        %1614 = vmatpush2.bf16.msra.mxu0 %v1535
        %1615 = vmatprep.mubr.bf16.mxu0 %v1369
        %1616 = vmatmul.mubr.bf16.gmra.mxu0 %v1368
        %v1617 = vpop.f32.mrf.mxu0
        %v1618 = vadd.f32 %v1418, %v1617
        %v1619 = vpop.f32.mrf.mxu0
        %v1620 = vadd.f32 %v1422, %v1619
        %v1621 = vpop.f32.mrf.mxu0
        %v1622 = vadd.f32 %v1418, %v1621
        %v1623 = vpop.f32.mrf.mxu0
        %v1624 = vadd.f32 %v1422, %v1623
        %1625 = vmatprep.mubr.bf16.mxu0 %v1371
        %1626 = vmatmul.mubr.bf16.gmra.mxu0 %v1370
        %v1627 = vpop.f32.mrf.mxu0
        %v1628 = vadd.f32 %v1418, %v1627
        %v1629 = vpop.f32.mrf.mxu0
        %v1630 = vadd.f32 %v1422, %v1629
        %v1631 = vpop.f32.mrf.mxu0
        %v1632 = vadd.f32 %v1418, %v1631
        %v1633 = vpop.f32.mrf.mxu0
        %v1634 = vadd.f32 %v1422, %v1633
        %1635 = vdwg.mxu0
        %v1636 = vmax.f32 %v1618, 0.0
        %v1637 = vmax.f32 %v1620, 0.0
        %v1638 = vmax.f32 %v1622, 0.0
        %v1639 = vmax.f32 %v1624, 0.0
        %v1640 = vmax.f32 %v1628, 0.0
        %v1641 = vmax.f32 %v1630, 0.0
        %v1642 = vmax.f32 %v1632, 0.0
        %v1643 = vmax.f32 %v1634, 0.0
        %v1644 = vpack.c.bf16 %v1638, %v1636
        %v1645 = vpack.c.bf16 %v1639, %v1637
        %v1646 = vpack.c.bf16 %v1642, %v1640
        %v1647 = vpack.c.bf16 %v1643, %v1641
        %v1648 = vld [vmem:[#allocation11] sm:$0xf]
        %v1649 = vld [vmem:[#allocation11 + $0x4] sm:$0xf]
        %v1650 = vld [vmem:[#allocation11 + $0x8] sm:$0xf]
        %v1651 = vld [vmem:[#allocation11 + $0xc] sm:$0xf]
        %v1652 = vld [vmem:[#allocation11 + $0x10] sm:$0xf]
        %v1653 = vld [vmem:[#allocation11 + $0x14] sm:$0xf]
        %v1654 = vld [vmem:[#allocation11 + $0x18] sm:$0xf]
        %v1655 = vld [vmem:[#allocation11 + $0x1c] sm:$0xf]
        %v1656 = vld [vmem:[#allocation11 + $0x20] sm:$0xf]
        %v1657 = vld [vmem:[#allocation11 + $0x24] sm:$0xf]
        %v1658 = vld [vmem:[#allocation11 + $0x28] sm:$0xf]
        %v1659 = vld [vmem:[#allocation11 + $0x2c] sm:$0xf]
        %v1660 = vld [vmem:[#allocation11 + $0x30] sm:$0xf]
        %v1661 = vld [vmem:[#allocation11 + $0x34] sm:$0xf]
        %v1662 = vld [vmem:[#allocation11 + $0x38] sm:$0xf]
        %v1663 = vld [vmem:[#allocation11 + $0x3c] sm:$0xf]
        %v1664 = vld [vmem:[#allocation11 + $0x40] sm:$0xf]
        %v1665 = vld [vmem:[#allocation11 + $0x44] sm:$0xf]
        %v1666 = vld [vmem:[#allocation11 + $0x48] sm:$0xf]
        %v1667 = vld [vmem:[#allocation11 + $0x4c] sm:$0xf]
        %v1668 = vld [vmem:[#allocation11 + $0x50] sm:$0xf]
        %v1669 = vld [vmem:[#allocation11 + $0x54] sm:$0xf]
        %v1670 = vld [vmem:[#allocation11 + $0x58] sm:$0xf]
        %v1671 = vld [vmem:[#allocation11 + $0x5c] sm:$0xf]
        %v1672 = vld [vmem:[#allocation11 + $0x60] sm:$0xf]
        %v1673 = vld [vmem:[#allocation11 + $0x64] sm:$0xf]
        %v1674 = vld [vmem:[#allocation11 + $0x68] sm:$0xf]
        %v1675 = vld [vmem:[#allocation11 + $0x6c] sm:$0xf]
        %v1676 = vld [vmem:[#allocation11 + $0x70] sm:$0xf]
        %v1677 = vld [vmem:[#allocation11 + $0x74] sm:$0xf]
        %v1678 = vld [vmem:[#allocation11 + $0x78] sm:$0xf]
        %v1679 = vld [vmem:[#allocation11 + $0x7c] sm:$0xf]
        %v1680 = vld [vmem:[%s7] sm:$0x1]
        %v1682 = vlaneseq
        %v1683 = vshrl.u32 %v1682, 7
        %v1684 = vsub.s32 0, %v1683
        %v1685 = vrot.slane %v1680, %v1684
        %v1719 = vunpack.c.l.b16 %v1648
        %v1720 = vunpack.c.l.b16 %v1649
        %v1721 = vunpack.c.l.b16 %v1650
        %v1722 = vunpack.c.l.b16 %v1651
        %v1723 = vunpack.c.l.b16 %v1652
        %v1724 = vunpack.c.l.b16 %v1653
        %v1725 = vunpack.c.l.b16 %v1654
        %v1726 = vunpack.c.l.b16 %v1655
        %v1727 = vunpack.c.l.b16 %v1656
        %v1728 = vunpack.c.l.b16 %v1657
        %v1729 = vunpack.c.l.b16 %v1658
        %v1730 = vunpack.c.l.b16 %v1659
        %v1731 = vunpack.c.l.b16 %v1660
        %v1732 = vunpack.c.l.b16 %v1661
        %v1733 = vunpack.c.l.b16 %v1662
        %v1734 = vunpack.c.l.b16 %v1663
        %v1735 = vunpack.c.l.b16 %v1664
        %v1736 = vunpack.c.l.b16 %v1665
        %v1737 = vunpack.c.l.b16 %v1666
        %v1738 = vunpack.c.l.b16 %v1667
        %v1739 = vunpack.c.l.b16 %v1668
        %v1740 = vunpack.c.l.b16 %v1669
        %v1741 = vunpack.c.l.b16 %v1670
        %v1742 = vunpack.c.l.b16 %v1671
        %v1743 = vunpack.c.l.b16 %v1672
        %v1744 = vunpack.c.l.b16 %v1673
        %v1745 = vunpack.c.l.b16 %v1674
        %v1746 = vunpack.c.l.b16 %v1675
        %v1747 = vunpack.c.l.b16 %v1676
        %v1748 = vunpack.c.l.b16 %v1677
        %v1749 = vunpack.c.l.b16 %v1678
        %v1750 = vunpack.c.l.b16 %v1679
        %v1751 = vpack.c.b16 %v1720, %v1719
        %v1752 = vpack.c.b16 %v1722, %v1721
        %v1753 = vpack.c.b16 %v1724, %v1723
        %v1754 = vpack.c.b16 %v1726, %v1725
        %v1755 = vpack.c.b16 %v1728, %v1727
        %v1756 = vpack.c.b16 %v1730, %v1729
        %v1757 = vpack.c.b16 %v1732, %v1731
        %v1758 = vpack.c.b16 %v1734, %v1733
        %v1759 = vpack.c.b16 %v1736, %v1735
        %v1760 = vpack.c.b16 %v1738, %v1737
        %v1761 = vpack.c.b16 %v1740, %v1739
        %v1762 = vpack.c.b16 %v1742, %v1741
        %v1763 = vpack.c.b16 %v1744, %v1743
        %v1764 = vpack.c.b16 %v1746, %v1745
        %v1765 = vpack.c.b16 %v1748, %v1747
        %v1766 = vpack.c.b16 %v1750, %v1749
        %1783 = vmatprep.subr.bf16.mxu0 0
        %1784 = vmatpush1.bf16.msra.mxu0 %v1758
        %1785 = vmatprep.subr.bf16.mxu0 0
        %1786 = vmatpush1.bf16.msra.mxu0 %v1757
        %1787 = vmatprep.subr.bf16.mxu0 0
        %1788 = vmatpush1.bf16.msra.mxu0 %v1756
        %1789 = vmatprep.subr.bf16.mxu0 0
        %1790 = vmatpush1.bf16.msra.mxu0 %v1755
        %1791 = vmatprep.subr.bf16.mxu0 0
        %1792 = vmatpush1.bf16.msra.mxu0 %v1754
        %1793 = vmatprep.subr.bf16.mxu0 0
        %1794 = vmatpush1.bf16.msra.mxu0 %v1753
        %1795 = vmatprep.subr.bf16.mxu0 0
        %1796 = vmatpush1.bf16.msra.mxu0 %v1752
        %1797 = vmatprep.subr.bf16.mxu0 0
        %1798 = vmatpush1.bf16.msra.mxu0 %v1751
        %1799 = vmatprep.subr.bf16.mxu0 0
        %1800 = vmatpush2.bf16.msra.mxu0 %v1766
        %1801 = vmatprep.subr.bf16.mxu0 0
        %1802 = vmatpush2.bf16.msra.mxu0 %v1765
        %1803 = vmatprep.subr.bf16.mxu0 0
        %1804 = vmatpush2.bf16.msra.mxu0 %v1764
        %1805 = vmatprep.subr.bf16.mxu0 0
        %1806 = vmatpush2.bf16.msra.mxu0 %v1763
        %1807 = vmatprep.subr.bf16.mxu0 0
        %1808 = vmatpush2.bf16.msra.mxu0 %v1762
        %1809 = vmatprep.subr.bf16.mxu0 0
        %1810 = vmatpush2.bf16.msra.mxu0 %v1761
        %1811 = vmatprep.subr.bf16.mxu0 0
        %1812 = vmatpush2.bf16.msra.mxu0 %v1760
        %1813 = vmatprep.subr.bf16.mxu0 0
        %1814 = vmatpush2.bf16.msra.mxu0 %v1759
        %1815 = vmatprep.mubr.bf16.mxu0 %v1645
        %1816 = vmatmul.mubr.bf16.gmra.mxu0 %v1644
        %v1817 = vpop.f32.mrf.mxu0
        %v1818 = vadd.f32 %v1685, %v1817
        %v1819 = vpop.f32.mrf.mxu0
        %v1820 = vpop.f32.mrf.mxu0
        %v1821 = vadd.f32 %v1685, %v1820
        %v1822 = vpop.f32.mrf.mxu0
        %1823 = vmatprep.mubr.bf16.mxu0 %v1647
        %1824 = vmatmul.mubr.bf16.gmra.mxu0 %v1646
        %v1825 = vpop.f32.mrf.mxu0
        %v1826 = vadd.f32 %v1685, %v1825
        %v1827 = vpop.f32.mrf.mxu0
        %v1828 = vpop.f32.mrf.mxu0
        %v1829 = vadd.f32 %v1685, %v1828
        %v1830 = vpop.f32.mrf.mxu0
        %1831 = vdwg.mxu0
        %v1832 = vld [vmem:[%s546] sm:$0xf]
        %v1833 = vld [vmem:[%s546 + $0x4] sm:$0xf]
        %v1834 = vpack.c.bf16 %v1821, %v1818
        %v1835 = vpack.c.bf16 %v1829, %v1826
        %v1838 = vunpack.c.l.b16 %v1832
        %v1839 = vunpack.c.l.b16 %v1833
        %v1840 = vpack.c.b16 %v1839, %v1838
        %vm1841 = vcmask 261120
        %v1843 = vsel %vm1841, %v1840, 0
        %1845 = vmatprep.subr.bf16.mxu0 0
        %1846 = vmatpush1.bf16.msra.mxu0 0
        %1847 = vmatprep.subr.bf16.mxu0 0
        %1848 = vmatpush1.bf16.msra.mxu0 0
        %1849 = vmatprep.subr.bf16.mxu0 0
        %1850 = vmatpush1.bf16.msra.mxu0 0
        %1851 = vmatprep.subr.bf16.mxu0 0
        %1852 = vmatpush1.bf16.msra.mxu0 0
        %1853 = vmatprep.subr.bf16.mxu0 0
        %1854 = vmatpush1.bf16.msra.mxu0 0
        %1855 = vmatprep.subr.bf16.mxu0 0
        %1856 = vmatpush1.bf16.msra.mxu0 0
        %1857 = vmatprep.subr.bf16.mxu0 0
        %1858 = vmatpush1.bf16.msra.mxu0 %v1835
        %1859 = vmatprep.subr.bf16.mxu0 0
        %1860 = vmatpush1.bf16.msra.mxu0 %v1834
        %1861 = vmatprep.subr.bf16.mxu0 0
        %1862 = vmatpush2.bf16.msra.mxu0 0
        %1863 = vmatprep.subr.bf16.mxu0 0
        %1864 = vmatpush2.bf16.msra.mxu0 0
        %1865 = vmatprep.subr.bf16.mxu0 0
        %1866 = vmatpush2.bf16.msra.mxu0 0
        %1867 = vmatprep.subr.bf16.mxu0 0
        %1868 = vmatpush2.bf16.msra.mxu0 0
        %1869 = vmatprep.subr.bf16.mxu0 0
        %1870 = vmatpush2.bf16.msra.mxu0 0
        %1871 = vmatprep.subr.bf16.mxu0 0
        %1872 = vmatpush2.bf16.msra.mxu0 0
        %1873 = vmatprep.subr.bf16.mxu0 0
        %1874 = vmatpush2.bf16.msra.mxu0 0
        %1875 = vmatprep.subr.bf16.mxu0 0
        %1876 = vmatpush2.bf16.msra.mxu0 0
        %1877 = vmatprep.mubr.bf16.mxu0 0
        %1878 = vmatmul.mubr.bf16.gmra.mxu0 %v1843
        %v1879 = vpop.f32.mrf.mxu0
        %v1880 = vadd.f32 0.0, %v1879
        %v1881 = vpop.f32.mrf.mxu0
        %v1882 = vpop.f32.mrf.mxu0
        %v1883 = vadd.f32 0.0, %v1882
        %v1884 = vpop.f32.mrf.mxu0
        %1885 = vdwg.mxu0
        %v1886 = vpack.c.bf16 %v1883, %v1880
        %v1887 = vld [vmem:[#allocation13] sm:$0xf]
        %v1888 = vld [vmem:[#allocation13 + $0x4] sm:$0xf]
        %v1889 = vld [vmem:[#allocation13 + $0x8] sm:$0xf]
        %v1890 = vld [vmem:[#allocation13 + $0xc] sm:$0xf]
        %v1891 = vld [vmem:[#allocation13 + $0x10] sm:$0xf]
        %v1892 = vld [vmem:[#allocation13 + $0x14] sm:$0xf]
        %v1893 = vld [vmem:[#allocation13 + $0x18] sm:$0xf]
        %v1894 = vld [vmem:[#allocation13 + $0x1c] sm:$0xf]
        %v1895 = vld [vmem:[#allocation13 + $0x20] sm:$0xf]
        %v1896 = vld [vmem:[#allocation13 + $0x24] sm:$0xf]
        %v1897 = vld [vmem:[#allocation13 + $0x28] sm:$0xf]
        %v1898 = vld [vmem:[#allocation13 + $0x2c] sm:$0xf]
        %v1899 = vld [vmem:[#allocation13 + $0x30] sm:$0xf]
        %v1900 = vld [vmem:[#allocation13 + $0x34] sm:$0xf]
        %v1901 = vld [vmem:[#allocation13 + $0x38] sm:$0xf]
        %v1902 = vld [vmem:[#allocation13 + $0x3c] sm:$0xf]
        %v1903 = vld [vmem:[%s537] sm:$0xf]
        %v1904 = vld [vmem:[%s537 + $0x4] sm:$0xf]
        %v1905 = vld [vmem:[#allocation14] sm:$0xf]
        %v1906 = vld [vmem:[#allocation14 + $0x4] sm:$0xf]
        %v1907 = vld [vmem:[#allocation14 + $0x8] sm:$0xf]
        %v1908 = vld [vmem:[#allocation14 + $0xc] sm:$0xf]
        %v1909 = vld [vmem:[#allocation14 + $0x10] sm:$0xf]
        %v1910 = vld [vmem:[#allocation14 + $0x14] sm:$0xf]
        %v1911 = vld [vmem:[#allocation14 + $0x18] sm:$0xf]
        %v1912 = vld [vmem:[#allocation14 + $0x1c] sm:$0xf]
        %v1913 = vld [vmem:[#allocation14 + $0x20] sm:$0xf]
        %v1914 = vld [vmem:[#allocation14 + $0x24] sm:$0xf]
        %v1915 = vld [vmem:[#allocation14 + $0x28] sm:$0xf]
        %v1916 = vld [vmem:[#allocation14 + $0x2c] sm:$0xf]
        %v1917 = vld [vmem:[#allocation14 + $0x30] sm:$0xf]
        %v1918 = vld [vmem:[#allocation14 + $0x34] sm:$0xf]
        %v1919 = vld [vmem:[#allocation14 + $0x38] sm:$0xf]
        %v1920 = vld [vmem:[#allocation14 + $0x3c] sm:$0xf]
        %v1923 = vunpack.c.l.b16 %v1903
        %v1924 = vunpack.c.l.b16 %v1904
        %v1925 = vpack.c.b16 %v1924, %v1923
        %v1943 = vunpack.c.l.b16 %v1905
        %v1944 = vunpack.c.l.b16 %v1906
        %v1945 = vunpack.c.l.b16 %v1907
        %v1946 = vunpack.c.l.b16 %v1908
        %v1947 = vunpack.c.l.b16 %v1909
        %v1948 = vunpack.c.l.b16 %v1910
        %v1949 = vunpack.c.l.b16 %v1911
        %v1950 = vunpack.c.l.b16 %v1912
        %v1951 = vunpack.c.l.b16 %v1913
        %v1952 = vunpack.c.l.b16 %v1914
        %v1953 = vunpack.c.l.b16 %v1915
        %v1954 = vunpack.c.l.b16 %v1916
        %v1955 = vunpack.c.l.b16 %v1917
        %v1956 = vunpack.c.l.b16 %v1918
        %v1957 = vunpack.c.l.b16 %v1919
        %v1958 = vunpack.c.l.b16 %v1920
        %v1959 = vpack.c.b16 %v1944, %v1943
        %v1960 = vpack.c.b16 %v1946, %v1945
        %v1961 = vpack.c.b16 %v1948, %v1947
        %v1962 = vpack.c.b16 %v1950, %v1949
        %v1963 = vpack.c.b16 %v1952, %v1951
        %v1964 = vpack.c.b16 %v1954, %v1953
        %v1965 = vpack.c.b16 %v1956, %v1955
        %v1966 = vpack.c.b16 %v1958, %v1957
        %1975 = vmatprep.subr.bf16.mxu0 0
        %1976 = vmatpush1.bf16.msra.mxu0 %v1966
        %1977 = vmatprep.subr.bf16.mxu0 0
        %1978 = vmatpush1.bf16.msra.mxu0 %v1965
        %1979 = vmatprep.subr.bf16.mxu0 0
        %1980 = vmatpush1.bf16.msra.mxu0 %v1964
        %1981 = vmatprep.subr.bf16.mxu0 0
        %1982 = vmatpush1.bf16.msra.mxu0 %v1963
        %1983 = vmatprep.subr.bf16.mxu0 0
        %1984 = vmatpush1.bf16.msra.mxu0 %v1962
        %1985 = vmatprep.subr.bf16.mxu0 0
        %1986 = vmatpush1.bf16.msra.mxu0 %v1961
        %1987 = vmatprep.subr.bf16.mxu0 0
        %1988 = vmatpush1.bf16.msra.mxu0 %v1960
        %1989 = vmatprep.subr.bf16.mxu0 0
        %1990 = vmatpush1.bf16.msra.mxu0 %v1959
        %1991 = vmatprep.subr.bf16.mxu0 0
        %1992 = vmatpush2.bf16.msra.mxu0 0
        %1993 = vmatprep.subr.bf16.mxu0 0
        %1994 = vmatpush2.bf16.msra.mxu0 0
        %1995 = vmatprep.subr.bf16.mxu0 0
        %1996 = vmatpush2.bf16.msra.mxu0 0
        %1997 = vmatprep.subr.bf16.mxu0 0
        %1998 = vmatpush2.bf16.msra.mxu0 0
        %1999 = vmatprep.subr.bf16.mxu0 0
        %2000 = vmatpush2.bf16.msra.mxu0 0
        %2001 = vmatprep.subr.bf16.mxu0 0
        %2002 = vmatpush2.bf16.msra.mxu0 0
        %2003 = vmatprep.subr.bf16.mxu0 0
        %2004 = vmatpush2.bf16.msra.mxu0 0
        %2005 = vmatprep.subr.bf16.mxu0 0
        %2006 = vmatpush2.bf16.msra.mxu0 0
        %2007 = vmatprep.mubr.bf16.mxu0 0
        %2008 = vmatmul.mubr.bf16.gmra.mxu0 %v1925
        %v2009 = vpop.f32.mrf.mxu0
        %v2010 = vadd.f32 0.0, %v2009
        %v2011 = vpop.f32.mrf.mxu0
        %v2012 = vpop.f32.mrf.mxu0
        %v2013 = vadd.f32 0.0, %v2012
        %v2014 = vpop.f32.mrf.mxu0
        %2015 = vdwg.mxu0
        %v2032 = vunpack.c.l.b16 %v1887
        %v2033 = vunpack.c.l.b16 %v1888
        %v2034 = vunpack.c.l.b16 %v1889
        %v2035 = vunpack.c.l.b16 %v1890
        %v2036 = vunpack.c.l.b16 %v1891
        %v2037 = vunpack.c.l.b16 %v1892
        %v2038 = vunpack.c.l.b16 %v1893
        %v2039 = vunpack.c.l.b16 %v1894
        %v2040 = vunpack.c.l.b16 %v1895
        %v2041 = vunpack.c.l.b16 %v1896
        %v2042 = vunpack.c.l.b16 %v1897
        %v2043 = vunpack.c.l.b16 %v1898
        %v2044 = vunpack.c.l.b16 %v1899
        %v2045 = vunpack.c.l.b16 %v1900
        %v2046 = vunpack.c.l.b16 %v1901
        %v2047 = vunpack.c.l.b16 %v1902
        %v2048 = vpack.c.b16 %v2033, %v2032
        %v2049 = vpack.c.b16 %v2035, %v2034
        %v2050 = vpack.c.b16 %v2037, %v2036
        %v2051 = vpack.c.b16 %v2039, %v2038
        %v2052 = vpack.c.b16 %v2041, %v2040
        %v2053 = vpack.c.b16 %v2043, %v2042
        %v2054 = vpack.c.b16 %v2045, %v2044
        %v2055 = vpack.c.b16 %v2047, %v2046
        %2064 = vmatprep.subr.bf16.mxu0 0
        %2065 = vmatpush1.bf16.msra.mxu0 %v2055
        %2066 = vmatprep.subr.bf16.mxu0 0
        %2067 = vmatpush1.bf16.msra.mxu0 %v2054
        %2068 = vmatprep.subr.bf16.mxu0 0
        %2069 = vmatpush1.bf16.msra.mxu0 %v2053
        %2070 = vmatprep.subr.bf16.mxu0 0
        %2071 = vmatpush1.bf16.msra.mxu0 %v2052
        %2072 = vmatprep.subr.bf16.mxu0 0
        %2073 = vmatpush1.bf16.msra.mxu0 %v2051
        %2074 = vmatprep.subr.bf16.mxu0 0
        %2075 = vmatpush1.bf16.msra.mxu0 %v2050
        %2076 = vmatprep.subr.bf16.mxu0 0
        %2077 = vmatpush1.bf16.msra.mxu0 %v2049
        %2078 = vmatprep.subr.bf16.mxu0 0
        %2079 = vmatpush1.bf16.msra.mxu0 %v2048
        %2080 = vmatprep.subr.bf16.mxu0 0
        %2081 = vmatpush2.bf16.msra.mxu0 0
        %2082 = vmatprep.subr.bf16.mxu0 0
        %2083 = vmatpush2.bf16.msra.mxu0 0
        %2084 = vmatprep.subr.bf16.mxu0 0
        %2085 = vmatpush2.bf16.msra.mxu0 0
        %2086 = vmatprep.subr.bf16.mxu0 0
        %2087 = vmatpush2.bf16.msra.mxu0 0
        %2088 = vmatprep.subr.bf16.mxu0 0
        %2089 = vmatpush2.bf16.msra.mxu0 0
        %2090 = vmatprep.subr.bf16.mxu0 0
        %2091 = vmatpush2.bf16.msra.mxu0 0
        %2092 = vmatprep.subr.bf16.mxu0 0
        %2093 = vmatpush2.bf16.msra.mxu0 0
        %2094 = vmatprep.subr.bf16.mxu0 0
        %2095 = vmatpush2.bf16.msra.mxu0 0
        %2096 = vmatprep.mubr.bf16.mxu0 0
        %2097 = vmatmul.mubr.bf16.gmra.mxu0 %v1886
        %v2098 = vpop.f32.mrf.mxu0
        %v2099 = vadd.f32 %v2010, %v2098
        %v2100 = vpop.f32.mrf.mxu0
        %v2101 = vpop.f32.mrf.mxu0
        %v2102 = vadd.f32 %v2013, %v2101
        %v2103 = vpop.f32.mrf.mxu0
        %2104 = vdwg.mxu0
        %v2105 = vld [vmem:[%s10] sm:$0x1]
        %v2107 = vlaneseq
        %v2108 = vshrl.u32 %v2107, 7
        %v2109 = vsub.s32 0, %v2108
        %v2110 = vrot.slane %v2105, %v2109
        %v2112 = vadd.f32 %v2099, %v2110
        %v2113 = vadd.f32 %v2102, %v2110
        %v2114 = vmax.f32 %v2112, 0.0
        %v2115 = vmax.f32 %v2113, 0.0
        %v2116 = vpack.c.bf16 %v2115, %v2114
        %v2117 = vld [vmem:[#allocation16] sm:$0xf]
        %v2118 = vld [vmem:[#allocation16 + $0x4] sm:$0xf]
        %v2119 = vld [vmem:[#allocation16 + $0x8] sm:$0xf]
        %v2120 = vld [vmem:[#allocation16 + $0xc] sm:$0xf]
        %v2121 = vld [vmem:[#allocation16 + $0x10] sm:$0xf]
        %v2122 = vld [vmem:[#allocation16 + $0x14] sm:$0xf]
        %v2123 = vld [vmem:[#allocation16 + $0x18] sm:$0xf]
        %v2124 = vld [vmem:[#allocation16 + $0x1c] sm:$0xf]
        %v2125 = vld [vmem:[#allocation16 + $0x20] sm:$0xf]
        %v2126 = vld [vmem:[#allocation16 + $0x24] sm:$0xf]
        %v2127 = vld [vmem:[#allocation16 + $0x28] sm:$0xf]
        %v2128 = vld [vmem:[#allocation16 + $0x2c] sm:$0xf]
        %v2129 = vld [vmem:[#allocation16 + $0x30] sm:$0xf]
        %v2130 = vld [vmem:[#allocation16 + $0x34] sm:$0xf]
        %v2131 = vld [vmem:[#allocation16 + $0x38] sm:$0xf]
        %v2132 = vld [vmem:[#allocation16 + $0x3c] sm:$0xf]
        %v2133 = vld [vmem:[%s12] sm:$0x1]
        %v2135 = vlaneseq
        %v2136 = vshrl.u32 %v2135, 7
        %v2137 = vsub.s32 0, %v2136
        %v2138 = vrot.slane %v2133, %v2137
        %v2156 = vunpack.c.l.b16 %v2117
        %v2157 = vunpack.c.l.b16 %v2118
        %v2158 = vunpack.c.l.b16 %v2119
        %v2159 = vunpack.c.l.b16 %v2120
        %v2160 = vunpack.c.l.b16 %v2121
        %v2161 = vunpack.c.l.b16 %v2122
        %v2162 = vunpack.c.l.b16 %v2123
        %v2163 = vunpack.c.l.b16 %v2124
        %v2164 = vunpack.c.l.b16 %v2125
        %v2165 = vunpack.c.l.b16 %v2126
        %v2166 = vunpack.c.l.b16 %v2127
        %v2167 = vunpack.c.l.b16 %v2128
        %v2168 = vunpack.c.l.b16 %v2129
        %v2169 = vunpack.c.l.b16 %v2130
        %v2170 = vunpack.c.l.b16 %v2131
        %v2171 = vunpack.c.l.b16 %v2132
        %v2172 = vpack.c.b16 %v2157, %v2156
        %v2173 = vpack.c.b16 %v2159, %v2158
        %v2174 = vpack.c.b16 %v2161, %v2160
        %v2175 = vpack.c.b16 %v2163, %v2162
        %v2176 = vpack.c.b16 %v2165, %v2164
        %v2177 = vpack.c.b16 %v2167, %v2166
        %v2178 = vpack.c.b16 %v2169, %v2168
        %v2179 = vpack.c.b16 %v2171, %v2170
        %2188 = vmatprep.subr.bf16.mxu0 0
        %2189 = vmatpush1.bf16.msra.mxu0 %v2179
        %2190 = vmatprep.subr.bf16.mxu0 0
        %2191 = vmatpush1.bf16.msra.mxu0 %v2178
        %2192 = vmatprep.subr.bf16.mxu0 0
        %2193 = vmatpush1.bf16.msra.mxu0 %v2177
        %2194 = vmatprep.subr.bf16.mxu0 0
        %2195 = vmatpush1.bf16.msra.mxu0 %v2176
        %2196 = vmatprep.subr.bf16.mxu0 0
        %2197 = vmatpush1.bf16.msra.mxu0 %v2175
        %2198 = vmatprep.subr.bf16.mxu0 0
        %2199 = vmatpush1.bf16.msra.mxu0 %v2174
        %2200 = vmatprep.subr.bf16.mxu0 0
        %2201 = vmatpush1.bf16.msra.mxu0 %v2173
        %2202 = vmatprep.subr.bf16.mxu0 0
        %2203 = vmatpush1.bf16.msra.mxu0 %v2172
        %2204 = vmatprep.subr.bf16.mxu0 0
        %2205 = vmatpush2.bf16.msra.mxu0 0
        %2206 = vmatprep.subr.bf16.mxu0 0
        %2207 = vmatpush2.bf16.msra.mxu0 0
        %2208 = vmatprep.subr.bf16.mxu0 0
        %2209 = vmatpush2.bf16.msra.mxu0 0
        %2210 = vmatprep.subr.bf16.mxu0 0
        %2211 = vmatpush2.bf16.msra.mxu0 0
        %2212 = vmatprep.subr.bf16.mxu0 0
        %2213 = vmatpush2.bf16.msra.mxu0 0
        %2214 = vmatprep.subr.bf16.mxu0 0
        %2215 = vmatpush2.bf16.msra.mxu0 0
        %2216 = vmatprep.subr.bf16.mxu0 0
        %2217 = vmatpush2.bf16.msra.mxu0 0
        %2218 = vmatprep.subr.bf16.mxu0 0
        %2219 = vmatpush2.bf16.msra.mxu0 0
        %2220 = vmatprep.mubr.bf16.mxu0 0
        %2221 = vmatmul.mubr.bf16.gmra.mxu0 %v2116
        %v2222 = vpop.f32.mrf.mxu0
        %v2223 = vadd.f32 %v2138, %v2222
        %v2224 = vpop.f32.mrf.mxu0
        %v2225 = vpop.f32.mrf.mxu0
        %v2226 = vadd.f32 %v2138, %v2225
        %v2227 = vpop.f32.mrf.mxu0
        %2228 = vdwg.mxu0
        %2229 = vst [vmem:[%s622] sm:$0xff] %v2223
        %2230 = vst [vmem:[%s622 + $0x8] sm:$0xff] %v2226
        %s2231 = sand.u32 %s332, 1
        %s2232 = scalar_lea.sflag [#allocation4], %s2231
        %s2233 = sand.u32 %s332, 1
        %s2234 = smul.addr %s2233, 16
        %s2235 = scalar_lea.vmem [#allocation17], %s2234
        // Predicated region
        $region109: #{tpu_custom_call.1} parent=71 // pred_check
          %p2236 = pneg %p342
        $region110: #{tpu_custom_call.1} parent=71 // pred_check_branch
          %2238 = sbr.rel (%p2236) target = $region112
        $region111: #{tpu_custom_call.1} parent=71 // pred_region
          %s2240 = ssub.s32 256, 256
          %2241 = vsyncadd %s2232, %s2240
          %s2242 = smul.addr %s36, 2
          %s2243 = smul.addr %s2242, 128
          %s2244 = scalar_lea.hbm %s13, %s2243
          %s2245 = sshll.u32 %s2235, 4
          %s2246 = int_to_ptr.vmem [resolvable:$true] %s2245
          %2251 = dma.vmem_to_hbm [thread:$0]  %s2246, 256, %s2244, %s2232, 128, 128, 8
        $region112: #{tpu_custom_call.1} parent=71 // pred_fallthru
          _
      $region72: #{tpu_custom_call.1} parent=5 // pred_fallthru
        _
      %p2252 = scmp.le.s32.totalorder 2, %s31
      // Predicated region
      $region113: #{tpu_custom_call.1} parent=5 // pred_check
        %p2253 = pneg %p2252
      $region114: #{tpu_custom_call.1} parent=5 // pred_check_branch
        %2255 = sbr.rel (%p2253) target = $region116
      $region115: #{tpu_custom_call.1} parent=5 // pred_region
        %s2256 = ssub.s32 %s31, 2
        // Predicated region
        $region117: #{tpu_custom_call.1} parent=115 // pred_check
          %p2257 = pneg %p348
        $region118: #{tpu_custom_call.1} parent=115 // pred_check_branch
          %2259 = sbr.rel (%p2257) target = $region120
        $region119: #{tpu_custom_call.1} parent=115 // pred_region
          %s2260 = sand.u32 %s333, 1
          %s2261 = scalar_lea.sflag [#allocation4], %s2260
          %s2262 = sand.u32 %s333, 1
          %s2263 = smul.addr %s2262, 16
          %s2264 = scalar_lea.vmem [#allocation17], %s2263
          %2265 = dma.done %s2261, 256
        $region120: #{tpu_custom_call.1} parent=115 // pred_fallthru
          _
      $region116: #{tpu_custom_call.1} parent=5 // pred_fallthru
        _
    $region6: #{tpu_custom_call.1} parent=1 // loop_footer
      %s35 = sadd.s32 1, %s31
    $region7: #{tpu_custom_call.1} parent=1 // loop_footer_branch
      %30 = sbr.rel target = $region3
    $region8: #{tpu_custom_call.1} parent=1 // loop_exit
      _
    %2266 = vsyncpa [#allocation3], 1
    %s2267 = scalar_lea.sflag [#allocation3], 1
    %2268 = vsyncpa %s2267, 1
    %2269 = vsyncpa [#allocation6], 1
    %s2270 = scalar_lea.sflag [#allocation6], 1
    %2271 = vsyncpa %s2270, 1
    %2272 = vsyncpa [#allocation9], 1
    %2273 = vsyncpa [#allocation12], 1
    %2274 = vsyncpa [#allocation15], 1
    %2275 = vsyncpa [#allocation4], 1
    %s2276 = scalar_lea.sflag [#allocation4], 1
    %2277 = vsyncpa %s2276, 1

</llo_original>
